<compile_context>
chip_gen: v6e
topology: v6e:2x2x1
jax: 0.10.0
libtpu: 0.0.40
codegen_flags: <defaults>
</compile_context>

<pallas_src>
import numpy as np
import jax
import jax.numpy as jnp
from jax.experimental import pallas as pl
from jax.experimental.pallas import tpu as pltpu

# ----------------------------- small synthetic config --------------------------------
B = 2            # batch
C_IN = 4         # in_channels
C_OUT = 32       # out_channels
T = 16           # temporal length
COND_DIM = 8     # cond_dim
K = 3            # kernel_size (padding = K // 2 = 1)
N_GROUPS = 8     # GroupNorm groups
GN_EPS = 1e-5
# TODO(synk): use_film_scale_modulation=True branch (scale/bias FiLM) not implemented;
#             this kernel covers the module's default (additive FiLM).

W_SMALL_ROWS = 40   # [conv1_w0 | conv1_w1 | conv1_w2 | res_w | cond_w], 8-aligned segments


# --------------------------------- in-kernel helpers ---------------------------------
def _dot(a, b):
    return jnp.dot(a, b, preferred_element_type=jnp.float32)


def _mish(v):
    # x * tanh(softplus(x)), stable softplus = max(x,0) + log(1 + exp(-|x|))
    sp = jnp.maximum(v, 0.0) + jnp.log(1.0 + jnp.exp(-jnp.abs(v)))
    return v * jnp.tanh(sp)


def _groupnorm(h, gavg, gamma, beta):
    # h: (T, C).  gavg: (C, C) constant with 1/(T*cpg) on same-group entries.
    s1 = jnp.sum(h, axis=0, keepdims=True)            # (1, C)  sublane reduce
    s2 = jnp.sum(h * h, axis=0, keepdims=True)        # (1, C)
    m = _dot(s1, gavg)                                 # per-channel group mean
    m2 = _dot(s2, gavg)                                # per-channel group E[x^2]
    var = m2 - m * m                                   # biased variance (matches torch)
    return (h - m) * jax.lax.rsqrt(var + GN_EPS) * gamma + beta


# ------------------------------------ Pallas kernel -----------------------------------
def _kernel(x_ref, cond_ref, w_ref, w2_ref, vec_ref, shift_ref, gavg_ref, out_ref):
    x = x_ref[0]                      # (T, C_IN)
    cond = cond_ref[0]                # (1, COND_DIM)
    s_dn = shift_ref[0]               # (T, T): row t picks row t-1 (0 at t=0)
    s_up = shift_ref[1]               # (T, T): row t picks row t+1 (0 at t=T-1)
    gavg = gavg_ref[...]              # (C_OUT, C_OUT)

    # ---- conv1: Conv1d(C_in, C_out, 3, pad=1) as 3 matmuls + constant shift matmuls --
    y0 = _dot(x, w_ref[0:C_IN, :])
    y1 = _dot(x, w_ref[8:8 + C_IN, :])
    y2 = _dot(x, w_ref[16:16 + C_IN, :])
    h = _dot(s_dn, y0) + y1 + _dot(s_up, y2) + vec_ref[0:1, :]        # + conv1 bias
    h = _mish(_groupnorm(h, gavg, vec_ref[1:2, :], vec_ref[2:3, :]))

    # ---- cond encoder: Mish -> Linear, additive FiLM (broadcast over T) --------------
    ce = _dot(_mish(cond), w_ref[32:32 + COND_DIM, :]) + vec_ref[3:4, :]   # (1, C_OUT)
    h = h + ce

    # ---- conv2: Conv1d(C_out, C_out, 3, pad=1) ----------------------------------------
    z0 = _dot(h, w2_ref[0:C_OUT, :])
    z1 = _dot(h, w2_ref[C_OUT:2 * C_OUT, :])
    z2 = _dot(h, w2_ref[2 * C_OUT:3 * C_OUT, :])
    h2 = _dot(s_dn, z0) + z1 + _dot(s_up, z2) + vec_ref[4:5, :]        # + conv2 bias
    h2 = _mish(_groupnorm(h2, gavg, vec_ref[5:6, :], vec_ref[6:7, :]))

    # ---- residual 1x1 conv ------------------------------------------------------------
    res = _dot(x, w_ref[24:24 + C_IN, :]) + vec_ref[7:8, :]
    out_ref[0] = h2 + res


def diffusion_cond_resblock(packed, x, cond):
    """x: (B, C_IN, T), cond: (B, COND_DIM) -> (B, C_OUT, T)."""
    w_small, w2, vecs, shifts, gavg = packed
    x_t = jnp.transpose(x, (0, 2, 1))          # (B, T, C_IN)  time-major, channels on lanes
    cond_r = cond[:, None, :]                  # (B, 1, COND_DIM)

    out = pl.pallas_call(
        _kernel,
        out_shape=jax.ShapeDtypeStruct((B, T, C_OUT), jnp.float32),
        grid_spec=pltpu.PrefetchScalarGridSpec(
            num_scalar_prefetch=0,
            grid=(B,),
            in_specs=[
                pl.BlockSpec((1, T, C_IN), lambda b: (b, 0, 0)),
                pl.BlockSpec((1, 1, COND_DIM), lambda b: (b, 0, 0)),
                pl.BlockSpec((W_SMALL_ROWS, C_OUT), lambda b: (0, 0)),
                pl.BlockSpec((3 * C_OUT, C_OUT), lambda b: (0, 0)),
                pl.BlockSpec((8, C_OUT), lambda b: (0, 0)),
                pl.BlockSpec((2, T, T), lambda b: (0, 0, 0)),
                pl.BlockSpec((C_OUT, C_OUT), lambda b: (0, 0)),
            ],
            out_specs=pl.BlockSpec((1, T, C_OUT), lambda b: (b, 0, 0)),
        ),
        compiler_params=pltpu.CompilerParams(dimension_semantics=("parallel",)),
    )(x_t, cond_r, w_small, w2, vecs, shifts, gavg)
    return jnp.transpose(out, (0, 2, 1))       # (B, C_OUT, T)


# ------------------------- host-side parameter packing (one-time) ---------------------
def pack_params(p):
    w_small = jnp.zeros((W_SMALL_ROWS, C_OUT), jnp.float32)
    w_small = w_small.at[0:C_IN].set(p["conv1_w"][:, :, 0].T)
    w_small = w_small.at[8:8 + C_IN].set(p["conv1_w"][:, :, 1].T)
    w_small = w_small.at[16:16 + C_IN].set(p["conv1_w"][:, :, 2].T)
    w_small = w_small.at[24:24 + C_IN].set(p["res_w"][:, :, 0].T)
    w_small = w_small.at[32:32 + COND_DIM].set(p["cond_w"].T)

    w2 = jnp.concatenate([p["conv2_w"][:, :, dk].T for dk in range(K)], axis=0)  # (3C, C)

    vecs = jnp.stack([p["conv1_b"], p["gn1_g"], p["gn1_b"], p["cond_b"],
                      p["conv2_b"], p["gn2_g"], p["gn2_b"], p["res_b"]], axis=0)  # (8, C)

    shifts = jnp.stack([jnp.eye(T, k=-1, dtype=jnp.float32),
                        jnp.eye(T, k=1, dtype=jnp.float32)], axis=0)              # (2, T, T)

    cpg = C_OUT // N_GROUPS
    gid = np.arange(C_OUT) // cpg
    gavg = (gid[:, None] == gid[None, :]).astype(np.float32) / float(T * cpg)     # (C, C)
    return w_small, w2, vecs, shifts, jnp.asarray(gavg)


def init_params(key):
    ks = jax.random.split(key, 8)
    nrm = lambda k, shape: 0.1 * jax.random.normal(k, shape, jnp.float32)
    return {
        "conv1_w": nrm(ks[0], (C_OUT, C_IN, K)),
        "conv1_b": nrm(ks[1], (C_OUT,)),
        "gn1_g": 1.0 + nrm(ks[2], (C_OUT,)),
        "gn1_b": nrm(ks[3], (C_OUT,)),
        "cond_w": nrm(ks[4], (C_OUT, COND_DIM)),
        "cond_b": jnp.zeros((C_OUT,), jnp.float32),
        "conv2_w": nrm(ks[5], (C_OUT, C_OUT, K)),
        "conv2_b": jnp.zeros((C_OUT,), jnp.float32),
        "gn2_g": 1.0 + nrm(ks[6], (C_OUT,)),
        "gn2_b": jnp.zeros((C_OUT,), jnp.float32),
        "res_w": nrm(ks[7], (C_OUT, C_IN, 1)),
        "res_b": jnp.zeros((C_OUT,), jnp.float32),
    }


# --------------------------- pure-JAX reference (independent path) --------------------
def reference_forward(x, cond, p):
    def conv1d(h, w, b, pad):
        out = jax.lax.conv_general_dilated(
            h, w, window_strides=(1,), padding=((pad, pad),),
            dimension_numbers=("NCH", "OIH", "NCH"))
        return out + b[None, :, None]

    def groupnorm(h, g, bta):
        b_, c_, t_ = h.shape
        hg = h.reshape(b_, N_GROUPS, c_ // N_GROUPS, t_)
        mu = hg.mean(axis=(2, 3), keepdims=True)
        var = hg.var(axis=(2, 3), keepdims=True)
        hn = ((hg - mu) / jnp.sqrt(var + GN_EPS)).reshape(b_, c_, t_)
        return hn * g[None, :, None] + bta[None, :, None]

    def mish(v):
        return v * jnp.tanh(jax.nn.softplus(v))

    out = mish(groupnorm(conv1d(x, p["conv1_w"], p["conv1_b"], 1), p["gn1_g"], p["gn1_b"]))
    ce = (mish(cond) @ p["cond_w"].T + p["cond_b"])[:, :, None]
    out = out + ce
    out = mish(groupnorm(conv1d(out, p["conv2_w"], p["conv2_b"], 1), p["gn2_g"], p["gn2_b"]))
    res = conv1d(x, p["res_w"], p["res_b"], 0)
    return out + res


if __name__ == "__main__":
    root = jax.random.PRNGKey(0)
    kp, kx, kc = jax.random.split(root, 3)
    params = init_params(kp)

    x = jax.random.normal(kx, (B, C_IN, T), jnp.float32)
    cond = jax.random.normal(kc, (B, COND_DIM), jnp.float32)

    packed = pack_params(params)
    out = jax.block_until_ready(diffusion_cond_resblock(packed, x, cond))

    ref = jax.block_until_ready(reference_forward(x, cond, params))
    np.testing.assert_allclose(np.asarray(out), np.asarray(ref), rtol=2e-3, atol=2e-3)
    assert out.shape == (B, C_OUT, T)
    assert np.isfinite(np.asarray(out)).all()
    print("KERNEL_OK")
</pallas_src>

<mosaic_0001>
module attributes {stable_mosaic.version = 11 : i64} {
  func.func @_kernel(%arg0: i32, %arg1: memref<1x16x4xf32, #tpu.memory_space<vmem>>, %arg2: memref<1x1x8xf32, #tpu.memory_space<vmem>>, %arg3: memref<40x32xf32, #tpu.memory_space<vmem>>, %arg4: memref<96x32xf32, #tpu.memory_space<vmem>>, %arg5: memref<8x32xf32, #tpu.memory_space<vmem>>, %arg6: memref<2x16x16xf32, #tpu.memory_space<vmem>>, %arg7: memref<32x32xf32, #tpu.memory_space<vmem>>, %arg8: memref<1x16x32xf32, #tpu.memory_space<vmem>>) attributes {dimension_semantics = [#tpu.dimension_semantics<parallel>], iteration_bounds = array<i64: 2>, scalar_prefetch = 0 : i64, scratch_operands = 0 : i64, tpu.core_type = #tpu.core_type<tc>, window_params = [{transform_indices = @transform_0, window_bounds = array<i64: 1, 16, 4>}, {transform_indices = @transform_1, window_bounds = array<i64: 1, 1, 8>}, {pipeline_mode = #tpu.pipeline_mode<synchronous>, transform_indices = @transform_2, window_bounds = array<i64: 40, 32>}, {pipeline_mode = #tpu.pipeline_mode<synchronous>, transform_indices = @transform_3, window_bounds = array<i64: 96, 32>}, {pipeline_mode = #tpu.pipeline_mode<synchronous>, transform_indices = @transform_4, window_bounds = array<i64: 8, 32>}, {pipeline_mode = #tpu.pipeline_mode<synchronous>, transform_indices = @transform_5, window_bounds = array<i64: 2, 16, 16>}, {pipeline_mode = #tpu.pipeline_mode<synchronous>, transform_indices = @transform_6, window_bounds = array<i64: 32, 32>}, {transform_indices = @transform_7, window_bounds = array<i64: 1, 16, 32>}]} {
    %c0 = arith.constant 0 : index
    %c0_0 = arith.constant 0 : index
    %c0_1 = arith.constant 0 : index
    %0 = vector.load %arg1[%c0, %c0_0, %c0_1] : memref<1x16x4xf32, #tpu.memory_space<vmem>>, vector<1x16x4xf32>
    %1 = vector.shape_cast %0 : vector<1x16x4xf32> to vector<16x4xf32>
    %c0_2 = arith.constant 0 : index
    %c0_3 = arith.constant 0 : index
    %c0_4 = arith.constant 0 : index
    %2 = vector.load %arg2[%c0_2, %c0_3, %c0_4] : memref<1x1x8xf32, #tpu.memory_space<vmem>>, vector<1x1x8xf32>
    %3 = vector.shape_cast %2 : vector<1x1x8xf32> to vector<1x8xf32>
    %c0_5 = arith.constant 0 : index
    %c0_6 = arith.constant 0 : index
    %c0_7 = arith.constant 0 : index
    %4 = vector.load %arg6[%c0_5, %c0_6, %c0_7] : memref<2x16x16xf32, #tpu.memory_space<vmem>>, vector<1x16x16xf32>
    %5 = vector.shape_cast %4 : vector<1x16x16xf32> to vector<16x16xf32>
    %c1 = arith.constant 1 : index
    %c0_8 = arith.constant 0 : index
    %c0_9 = arith.constant 0 : index
    %6 = vector.load %arg6[%c1, %c0_8, %c0_9] : memref<2x16x16xf32, #tpu.memory_space<vmem>>, vector<1x16x16xf32>
    %7 = vector.shape_cast %6 : vector<1x16x16xf32> to vector<16x16xf32>
    %c0_10 = arith.constant 0 : index
    %c0_11 = arith.constant 0 : index
    %8 = vector.load %arg7[%c0_10, %c0_11] : memref<32x32xf32, #tpu.memory_space<vmem>>, vector<32x32xf32>
    %c0_12 = arith.constant 0 : index
    %c0_13 = arith.constant 0 : index
    %9 = vector.load %arg3[%c0_12, %c0_13] : memref<40x32xf32, #tpu.memory_space<vmem>>, vector<4x32xf32>
    %cst = arith.constant dense<0.000000e+00> : vector<16x32xf32>
    %10 = tpu.matmul %1, %9, %cst {dimension_numbers = #tpu.dot_dimension_numbers<[1], [0], [0], [1], [0, 0, 1, 1], [], []>} : vector<16x4xf32>, vector<4x32xf32>, vector<16x32xf32> -> vector<16x32xf32>
    %c8 = arith.constant 8 : index
    %c0_14 = arith.constant 0 : index
    %11 = vector.load %arg3[%c8, %c0_14] : memref<40x32xf32, #tpu.memory_space<vmem>>, vector<4x32xf32>
    %cst_15 = arith.constant dense<0.000000e+00> : vector<16x32xf32>
    %12 = tpu.matmul %1, %11, %cst_15 {dimension_numbers = #tpu.dot_dimension_numbers<[1], [0], [0], [1], [0, 0, 1, 1], [], []>} : vector<16x4xf32>, vector<4x32xf32>, vector<16x32xf32> -> vector<16x32xf32>
    %c16 = arith.constant 16 : index
    %c0_16 = arith.constant 0 : index
    %13 = vector.load %arg3[%c16, %c0_16] : memref<40x32xf32, #tpu.memory_space<vmem>>, vector<4x32xf32>
    %cst_17 = arith.constant dense<0.000000e+00> : vector<16x32xf32>
    %14 = tpu.matmul %1, %13, %cst_17 {dimension_numbers = #tpu.dot_dimension_numbers<[1], [0], [0], [1], [0, 0, 1, 1], [], []>} : vector<16x4xf32>, vector<4x32xf32>, vector<16x32xf32> -> vector<16x32xf32>
    %cst_18 = arith.constant dense<0.000000e+00> : vector<16x32xf32>
    %15 = tpu.matmul %5, %10, %cst_18 {dimension_numbers = #tpu.dot_dimension_numbers<[1], [0], [0], [1], [0, 0, 1, 1], [], []>} : vector<16x16xf32>, vector<16x32xf32>, vector<16x32xf32> -> vector<16x32xf32>
    %16 = arith.addf %15, %12 : vector<16x32xf32>
    %cst_19 = arith.constant dense<0.000000e+00> : vector<16x32xf32>
    %17 = tpu.matmul %7, %14, %cst_19 {dimension_numbers = #tpu.dot_dimension_numbers<[1], [0], [0], [1], [0, 0, 1, 1], [], []>} : vector<16x16xf32>, vector<16x32xf32>, vector<16x32xf32> -> vector<16x32xf32>
    %18 = arith.addf %16, %17 : vector<16x32xf32>
    %c0_20 = arith.constant 0 : index
    %c0_21 = arith.constant 0 : index
    %19 = vector.load %arg5[%c0_20, %c0_21] : memref<8x32xf32, #tpu.memory_space<vmem>>, vector<1x32xf32>
    %20 = vector.broadcast %19 : vector<1x32xf32> to vector<16x32xf32>
    %21 = arith.addf %18, %20 : vector<16x32xf32>
    %c1_22 = arith.constant 1 : index
    %c0_23 = arith.constant 0 : index
    %22 = vector.load %arg5[%c1_22, %c0_23] : memref<8x32xf32, #tpu.memory_space<vmem>>, vector<1x32xf32>
    %c2 = arith.constant 2 : index
    %c0_24 = arith.constant 0 : index
    %23 = vector.load %arg5[%c2, %c0_24] : memref<8x32xf32, #tpu.memory_space<vmem>>, vector<1x32xf32>
    %cst_25 = arith.constant dense<0.000000e+00> : vector<32xf32>
    %24 = vector.multi_reduction <add>, %21, %cst_25 [0] : vector<16x32xf32> to vector<32xf32>
    %25 = vector.shape_cast %24 : vector<32xf32> to vector<1x32xf32>
    %26 = arith.mulf %21, %21 : vector<16x32xf32>
    %cst_26 = arith.constant dense<0.000000e+00> : vector<32xf32>
    %27 = vector.multi_reduction <add>, %26, %cst_26 [0] : vector<16x32xf32> to vector<32xf32>
    %28 = vector.shape_cast %27 : vector<32xf32> to vector<1x32xf32>
    %cst_27 = arith.constant dense<0.000000e+00> : vector<1x32xf32>
    %29 = tpu.matmul %25, %8, %cst_27 {dimension_numbers = #tpu.dot_dimension_numbers<[1], [0], [0], [1], [0, 0, 1, 1], [], []>} : vector<1x32xf32>, vector<32x32xf32>, vector<1x32xf32> -> vector<1x32xf32>
    %cst_28 = arith.constant dense<0.000000e+00> : vector<1x32xf32>
    %30 = tpu.matmul %28, %8, %cst_28 {dimension_numbers = #tpu.dot_dimension_numbers<[1], [0], [0], [1], [0, 0, 1, 1], [], []>} : vector<1x32xf32>, vector<32x32xf32>, vector<1x32xf32> -> vector<1x32xf32>
    %31 = arith.mulf %29, %29 : vector<1x32xf32>
    %32 = arith.subf %30, %31 : vector<1x32xf32>
    %33 = vector.broadcast %29 : vector<1x32xf32> to vector<16x32xf32>
    %34 = arith.subf %21, %33 : vector<16x32xf32>
    %cst_29 = arith.constant 9.99999974E-6 : f32
    %35 = vector.broadcast %cst_29 : f32 to vector<1x32xf32>
    %36 = arith.addf %32, %35 : vector<1x32xf32>
    %37 = math.rsqrt %36 : vector<1x32xf32>
    %38 = vector.broadcast %37 : vector<1x32xf32> to vector<16x32xf32>
    %39 = arith.mulf %34, %38 : vector<16x32xf32>
    %40 = vector.broadcast %22 : vector<1x32xf32> to vector<16x32xf32>
    %41 = arith.mulf %39, %40 : vector<16x32xf32>
    %42 = vector.broadcast %23 : vector<1x32xf32> to vector<16x32xf32>
    %43 = arith.addf %41, %42 : vector<16x32xf32>
    %cst_30 = arith.constant 0.000000e+00 : f32
    %44 = vector.broadcast %cst_30 : f32 to vector<16x32xf32>
    %45 = arith.maximumf %43, %44 : vector<16x32xf32>
    %46 = math.absf %43 : vector<16x32xf32>
    %cst_31 = arith.constant 0.000000e+00 : f32
    %47 = vector.broadcast %cst_31 : f32 to vector<16x32xf32>
    %48 = arith.subf %47, %46 : vector<16x32xf32>
    %49 = math.exp %48 : vector<16x32xf32>
    %cst_32 = arith.constant 1.000000e+00 : f32
    %50 = vector.broadcast %cst_32 : f32 to vector<16x32xf32>
    %51 = arith.addf %50, %49 : vector<16x32xf32>
    %52 = math.log %51 : vector<16x32xf32>
    %53 = arith.addf %45, %52 : vector<16x32xf32>
    %54 = math.tanh %53 : vector<16x32xf32>
    %55 = arith.mulf %43, %54 : vector<16x32xf32>
    %cst_33 = arith.constant 0.000000e+00 : f32
    %56 = vector.broadcast %cst_33 : f32 to vector<1x8xf32>
    %57 = arith.maximumf %3, %56 : vector<1x8xf32>
    %58 = math.absf %3 : vector<1x8xf32>
    %cst_34 = arith.constant 0.000000e+00 : f32
    %59 = vector.broadcast %cst_34 : f32 to vector<1x8xf32>
    %60 = arith.subf %59, %58 : vector<1x8xf32>
    %61 = math.exp %60 : vector<1x8xf32>
    %cst_35 = arith.constant 1.000000e+00 : f32
    %62 = vector.broadcast %cst_35 : f32 to vector<1x8xf32>
    %63 = arith.addf %62, %61 : vector<1x8xf32>
    %64 = math.log %63 : vector<1x8xf32>
    %65 = arith.addf %57, %64 : vector<1x8xf32>
    %66 = math.tanh %65 : vector<1x8xf32>
    %67 = arith.mulf %3, %66 : vector<1x8xf32>
    %c32 = arith.constant 32 : index
    %c0_36 = arith.constant 0 : index
    %68 = vector.load %arg3[%c32, %c0_36] : memref<40x32xf32, #tpu.memory_space<vmem>>, vector<8x32xf32>
    %cst_37 = arith.constant dense<0.000000e+00> : vector<1x32xf32>
    %69 = tpu.matmul %67, %68, %cst_37 {dimension_numbers = #tpu.dot_dimension_numbers<[1], [0], [0], [1], [0, 0, 1, 1], [], []>} : vector<1x8xf32>, vector<8x32xf32>, vector<1x32xf32> -> vector<1x32xf32>
    %c3 = arith.constant 3 : index
    %c0_38 = arith.constant 0 : index
    %70 = vector.load %arg5[%c3, %c0_38] : memref<8x32xf32, #tpu.memory_space<vmem>>, vector<1x32xf32>
    %71 = arith.addf %69, %70 : vector<1x32xf32>
    %72 = vector.broadcast %71 : vector<1x32xf32> to vector<16x32xf32>
    %73 = arith.addf %55, %72 : vector<16x32xf32>
    %c0_39 = arith.constant 0 : index
    %c0_40 = arith.constant 0 : index
    %74 = vector.load %arg4[%c0_39, %c0_40] : memref<96x32xf32, #tpu.memory_space<vmem>>, vector<32x32xf32>
    %cst_41 = arith.constant dense<0.000000e+00> : vector<16x32xf32>
    %75 = tpu.matmul %73, %74, %cst_41 {dimension_numbers = #tpu.dot_dimension_numbers<[1], [0], [0], [1], [0, 0, 1, 1], [], []>} : vector<16x32xf32>, vector<32x32xf32>, vector<16x32xf32> -> vector<16x32xf32>
    %c32_42 = arith.constant 32 : index
    %c0_43 = arith.constant 0 : index
    %76 = vector.load %arg4[%c32_42, %c0_43] : memref<96x32xf32, #tpu.memory_space<vmem>>, vector<32x32xf32>
    %cst_44 = arith.constant dense<0.000000e+00> : vector<16x32xf32>
    %77 = tpu.matmul %73, %76, %cst_44 {dimension_numbers = #tpu.dot_dimension_numbers<[1], [0], [0], [1], [0, 0, 1, 1], [], []>} : vector<16x32xf32>, vector<32x32xf32>, vector<16x32xf32> -> vector<16x32xf32>
    %c64 = arith.constant 64 : index
    %c0_45 = arith.constant 0 : index
    %78 = vector.load %arg4[%c64, %c0_45] : memref<96x32xf32, #tpu.memory_space<vmem>>, vector<32x32xf32>
    %cst_46 = arith.constant dense<0.000000e+00> : vector<16x32xf32>
    %79 = tpu.matmul %73, %78, %cst_46 {dimension_numbers = #tpu.dot_dimension_numbers<[1], [0], [0], [1], [0, 0, 1, 1], [], []>} : vector<16x32xf32>, vector<32x32xf32>, vector<16x32xf32> -> vector<16x32xf32>
    %cst_47 = arith.constant dense<0.000000e+00> : vector<16x32xf32>
    %80 = tpu.matmul %5, %75, %cst_47 {dimension_numbers = #tpu.dot_dimension_numbers<[1], [0], [0], [1], [0, 0, 1, 1], [], []>} : vector<16x16xf32>, vector<16x32xf32>, vector<16x32xf32> -> vector<16x32xf32>
    %81 = arith.addf %80, %77 : vector<16x32xf32>
    %cst_48 = arith.constant dense<0.000000e+00> : vector<16x32xf32>
    %82 = tpu.matmul %7, %79, %cst_48 {dimension_numbers = #tpu.dot_dimension_numbers<[1], [0], [0], [1], [0, 0, 1, 1], [], []>} : vector<16x16xf32>, vector<16x32xf32>, vector<16x32xf32> -> vector<16x32xf32>
    %83 = arith.addf %81, %82 : vector<16x32xf32>
    %c4 = arith.constant 4 : index
    %c0_49 = arith.constant 0 : index
    %84 = vector.load %arg5[%c4, %c0_49] : memref<8x32xf32, #tpu.memory_space<vmem>>, vector<1x32xf32>
    %85 = vector.broadcast %84 : vector<1x32xf32> to vector<16x32xf32>
    %86 = arith.addf %83, %85 : vector<16x32xf32>
    %c5 = arith.constant 5 : index
    %c0_50 = arith.constant 0 : index
    %87 = vector.load %arg5[%c5, %c0_50] : memref<8x32xf32, #tpu.memory_space<vmem>>, vector<1x32xf32>
    %c6 = arith.constant 6 : index
    %c0_51 = arith.constant 0 : index
    %88 = vector.load %arg5[%c6, %c0_51] : memref<8x32xf32, #tpu.memory_space<vmem>>, vector<1x32xf32>
    %cst_52 = arith.constant dense<0.000000e+00> : vector<32xf32>
    %89 = vector.multi_reduction <add>, %86, %cst_52 [0] : vector<16x32xf32> to vector<32xf32>
    %90 = vector.shape_cast %89 : vector<32xf32> to vector<1x32xf32>
    %91 = arith.mulf %86, %86 : vector<16x32xf32>
    %cst_53 = arith.constant dense<0.000000e+00> : vector<32xf32>
    %92 = vector.multi_reduction <add>, %91, %cst_53 [0] : vector<16x32xf32> to vector<32xf32>
    %93 = vector.shape_cast %92 : vector<32xf32> to vector<1x32xf32>
    %cst_54 = arith.constant dense<0.000000e+00> : vector<1x32xf32>
    %94 = tpu.matmul %90, %8, %cst_54 {dimension_numbers = #tpu.dot_dimension_numbers<[1], [0], [0], [1], [0, 0, 1, 1], [], []>} : vector<1x32xf32>, vector<32x32xf32>, vector<1x32xf32> -> vector<1x32xf32>
    %cst_55 = arith.constant dense<0.000000e+00> : vector<1x32xf32>
    %95 = tpu.matmul %93, %8, %cst_55 {dimension_numbers = #tpu.dot_dimension_numbers<[1], [0], [0], [1], [0, 0, 1, 1], [], []>} : vector<1x32xf32>, vector<32x32xf32>, vector<1x32xf32> -> vector<1x32xf32>
    %96 = arith.mulf %94, %94 : vector<1x32xf32>
    %97 = arith.subf %95, %96 : vector<1x32xf32>
    %98 = vector.broadcast %94 : vector<1x32xf32> to vector<16x32xf32>
    %99 = arith.subf %86, %98 : vector<16x32xf32>
    %cst_56 = arith.constant 9.99999974E-6 : f32
    %100 = vector.broadcast %cst_56 : f32 to vector<1x32xf32>
    %101 = arith.addf %97, %100 : vector<1x32xf32>
    %102 = math.rsqrt %101 : vector<1x32xf32>
    %103 = vector.broadcast %102 : vector<1x32xf32> to vector<16x32xf32>
    %104 = arith.mulf %99, %103 : vector<16x32xf32>
    %105 = vector.broadcast %87 : vector<1x32xf32> to vector<16x32xf32>
    %106 = arith.mulf %104, %105 : vector<16x32xf32>
    %107 = vector.broadcast %88 : vector<1x32xf32> to vector<16x32xf32>
    %108 = arith.addf %106, %107 : vector<16x32xf32>
    %cst_57 = arith.constant 0.000000e+00 : f32
    %109 = vector.broadcast %cst_57 : f32 to vector<16x32xf32>
    %110 = arith.maximumf %108, %109 : vector<16x32xf32>
    %111 = math.absf %108 : vector<16x32xf32>
    %cst_58 = arith.constant 0.000000e+00 : f32
    %112 = vector.broadcast %cst_58 : f32 to vector<16x32xf32>
    %113 = arith.subf %112, %111 : vector<16x32xf32>
    %114 = math.exp %113 : vector<16x32xf32>
    %cst_59 = arith.constant 1.000000e+00 : f32
    %115 = vector.broadcast %cst_59 : f32 to vector<16x32xf32>
    %116 = arith.addf %115, %114 : vector<16x32xf32>
    %117 = math.log %116 : vector<16x32xf32>
    %118 = arith.addf %110, %117 : vector<16x32xf32>
    %119 = math.tanh %118 : vector<16x32xf32>
    %120 = arith.mulf %108, %119 : vector<16x32xf32>
    %c24 = arith.constant 24 : index
    %c0_60 = arith.constant 0 : index
    %121 = vector.load %arg3[%c24, %c0_60] : memref<40x32xf32, #tpu.memory_space<vmem>>, vector<4x32xf32>
    %cst_61 = arith.constant dense<0.000000e+00> : vector<16x32xf32>
    %122 = tpu.matmul %1, %121, %cst_61 {dimension_numbers = #tpu.dot_dimension_numbers<[1], [0], [0], [1], [0, 0, 1, 1], [], []>} : vector<16x4xf32>, vector<4x32xf32>, vector<16x32xf32> -> vector<16x32xf32>
    %c7 = arith.constant 7 : index
    %c0_62 = arith.constant 0 : index
    %123 = vector.load %arg5[%c7, %c0_62] : memref<8x32xf32, #tpu.memory_space<vmem>>, vector<1x32xf32>
    %124 = vector.broadcast %123 : vector<1x32xf32> to vector<16x32xf32>
    %125 = arith.addf %122, %124 : vector<16x32xf32>
    %126 = arith.addf %120, %125 : vector<16x32xf32>
    %c0_63 = arith.constant 0 : index
    %c0_64 = arith.constant 0 : index
    %c0_65 = arith.constant 0 : index
    %127 = vector.load %arg8[%c0_63, %c0_64, %c0_65] : memref<1x16x32xf32, #tpu.memory_space<vmem>>, vector<1x16x32xf32>
    %128 = vector.shape_cast %127 : vector<1x16x32xf32> to vector<16x32xf32>
    %129 = vector.shape_cast %126 : vector<16x32xf32> to vector<1x16x32xf32>
    tpu.vector_store %arg8[%c0_63, %c0_64, %c0_65], %129 {strides = array<i32>} : memref<1x16x32xf32, #tpu.memory_space<vmem>>, vector<1x16x32xf32>,
    return
  }
  func.func @transform_0(%arg0: i32) -> (i32, i32, i32) {
    %c0_i32 = arith.constant 0 : i32
    %c0_i32_0 = arith.constant 0 : i32
    %c0_i32_1 = arith.constant 0 : i32
    return %arg0, %c0_i32, %c0_i32_0 : i32, i32, i32
  }
  func.func @transform_1(%arg0: i32) -> (i32, i32, i32) {
    %c0_i32 = arith.constant 0 : i32
    %c0_i32_0 = arith.constant 0 : i32
    %c0_i32_1 = arith.constant 0 : i32
    return %arg0, %c0_i32, %c0_i32_0 : i32, i32, i32
  }
  func.func @transform_2(%arg0: i32) -> (i32, i32) {
    %c0_i32 = arith.constant 0 : i32
    %c0_i32_0 = arith.constant 0 : i32
    %c0_i32_1 = arith.constant 0 : i32
    return %c0_i32, %c0_i32_0 : i32, i32
  }
  func.func @transform_3(%arg0: i32) -> (i32, i32) {
    %c0_i32 = arith.constant 0 : i32
    %c0_i32_0 = arith.constant 0 : i32
    %c0_i32_1 = arith.constant 0 : i32
    return %c0_i32, %c0_i32_0 : i32, i32
  }
  func.func @transform_4(%arg0: i32) -> (i32, i32) {
    %c0_i32 = arith.constant 0 : i32
    %c0_i32_0 = arith.constant 0 : i32
    %c0_i32_1 = arith.constant 0 : i32
    return %c0_i32, %c0_i32_0 : i32, i32
  }
  func.func @transform_5(%arg0: i32) -> (i32, i32, i32) {
    %c0_i32 = arith.constant 0 : i32
    %c0_i32_0 = arith.constant 0 : i32
    %c0_i32_1 = arith.constant 0 : i32
    %c0_i32_2 = arith.constant 0 : i32
    return %c0_i32, %c0_i32_0, %c0_i32_1 : i32, i32, i32
  }
  func.func @transform_6(%arg0: i32) -> (i32, i32) {
    %c0_i32 = arith.constant 0 : i32
    %c0_i32_0 = arith.constant 0 : i32
    %c0_i32_1 = arith.constant 0 : i32
    return %c0_i32, %c0_i32_0 : i32, i32
  }
  func.func @transform_7(%arg0: i32) -> (i32, i32, i32) {
    %c0_i32 = arith.constant 0 : i32
    %c0_i32_0 = arith.constant 0 : i32
    %c0_i32_1 = arith.constant 0 : i32
    return %arg0, %c0_i32, %c0_i32_0 : i32, i32, i32
  }
}

</mosaic_0001>

<llo_original>
// kernel: tpu_custom_call.1
$region0: #{tpu_custom_call.1}
  #allocation0 [shape = 'u32[]', space=smem, size = 0x4, offset = 0x4, fixed_abs, tag = 'smem constant byte address 0x4 - core index']
  #allocation1 [shape = 'u32[144,128]{1,0:T(1,128)}', space=vmem, size = 0x12000, scoped, tag = 'internal scratch']
  %s0 = inlined_call_operand.vmem [shape: f32[2,16,4], index: 0, kind: input, shape index: {}]
  %s1 = inlined_call_operand.vmem [shape: f32[2,1,8], index: 1, kind: input, shape index: {}]
  %s2 = inlined_call_operand.vmem [shape: f32[40,32], index: 2, kind: input, shape index: {}]
  %s3 = inlined_call_operand.vmem [shape: f32[96,32], index: 3, kind: input, shape index: {}]
  %s4 = inlined_call_operand.vmem [shape: f32[8,32], index: 4, kind: input, shape index: {}]
  %s5 = inlined_call_operand.vmem [shape: f32[2,16,16], index: 5, kind: input, shape index: {}]
  %s6 = inlined_call_operand.vmem [shape: f32[32,32], index: 6, kind: input, shape index: {}]
  %s7 = inlined_call_operand.hbm [shape: f32[2,16,32], index: 7, kind: output, shape index: {}]
  %s8 = sld [smem:[#allocation0]]
  $region61: #{tpu_custom_call.1} parent=0
    _
  %s10 = ssub.s32 1, %s8
  %s11 = scalar_select 0, %s10, %s8
  $region1: #{tpu_custom_call.1} parent=0
    #allocation2 [shape = 'u8[16384]{0}', space=vmem, size = 0x4000, scoped, tag = 'output window, operand 0']
    #allocation3 [shape = 's32[2]{0}', space=sflag, size = 0x8, scoped, tag = 'scoped memory for tpu_custom_call.1']
    %12 = vsyncpa [#allocation3], 0
    %s13 = scalar_lea.sflag [#allocation3], 1
    %14 = vsyncpa %s13, 0
    loop: start=0, step=1, limit=4
    $region2: #{tpu_custom_call.1} parent=1 // loop_pre_header
      _
    $region3: #{tpu_custom_call.1} parent=1 // loop_header
      %s16 = sphi 0, %s20
      %p17 = scmp.ge.s32.totalorder %s16, 4
      %s26 = sphi 0, %s28
      %s29 = sphi 0, %s26
      %s30 = sphi 0, %s29
      %s46 = sphi 0, %s30
      %s52 = sphi 0, %s54
      %s55 = sphi 0, %s52
      %s56 = sphi 0, %s55
      %s72 = sphi 0, %s56
      %s76 = sphi 0, %s76
      %s78 = sphi 0, %s76
      %s79 = sphi 0, %s78
      %s93 = sphi 0, %s79
      %s97 = sphi 0, %s97
      %s99 = sphi 0, %s97
      %s100 = sphi 0, %s99
      %s114 = sphi 0, %s100
      %s118 = sphi 0, %s118
      %s120 = sphi 0, %s118
      %s121 = sphi 0, %s120
      %s135 = sphi 0, %s121
      %s139 = sphi 0, %s139
      %s141 = sphi 0, %s139
      %s142 = sphi 0, %s141
      %s156 = sphi 0, %s142
      %s160 = sphi 0, %s160
      %s162 = sphi 0, %s160
      %s163 = sphi 0, %s162
      %s177 = sphi 0, %s163
      %s183 = sphi 0, %s185
      %s186 = sphi 0, %s183
      %s187 = sphi 0, %s186
      %s203 = sphi 0, %s187
    $region4: #{tpu_custom_call.1} parent=1 // loop_header_branch
      %19 = sbr.rel (%p17) target = $region8
    $region5: #{tpu_custom_call.1} parent=1 // loop_body
      %s21 = ssub.s32 %s16, 1
      %s22 = ssub.s32 %s16, 2
      %s23 = sadd.s32 %s16, 1
      %s24 = ssub.s32 %s16, %s23
      %p25 = scmp.eq.s32.totalorder %s24, 0
      %s27 = sadd.s32 %s26, 1
      %s28 = scalar_select %p25, %s26, %s27
      %p31 = pneg %p25
      %p32 = scmp.eq.s32.totalorder %s16, 1
      %p33 = por %p31, %p32
      %p34 = scmp.ne.s32.totalorder %s26, %s29
      %p35 = scmp.eq.s32.totalorder %s16, 0
      %p36 = por %p34, %p35
      %p37 = scmp.ne.s32.totalorder %s26, %s29
      %p38 = scmp.eq.s32.totalorder %s21, 1
      %p39 = por %p37, %p38
      %p40 = scmp.ne.s32.totalorder %s29, %s30
      %p41 = scmp.eq.s32.totalorder %s21, 0
      %p42 = por %p40, %p41
      %p43 = scmp.ne.s32.totalorder %s29, %s30
      %p44 = scmp.eq.s32.totalorder %s22, 1
      %p45 = por %p43, %p44
      %p47 = scmp.ne.s32.totalorder %s30, %s46
      %p48 = scmp.eq.s32.totalorder %s22, 0
      %p49 = por %p47, %p48
      %s50 = ssub.s32 %s16, %s23
      %p51 = scmp.eq.s32.totalorder %s50, 0
      %s53 = sadd.s32 %s52, 1
      %s54 = scalar_select %p51, %s52, %s53
      %p57 = pneg %p51
      %p58 = scmp.eq.s32.totalorder %s16, 1
      %p59 = por %p57, %p58
      %p60 = scmp.ne.s32.totalorder %s52, %s55
      %p61 = scmp.eq.s32.totalorder %s16, 0
      %p62 = por %p60, %p61
      %p63 = scmp.ne.s32.totalorder %s52, %s55
      %p64 = scmp.eq.s32.totalorder %s21, 1
      %p65 = por %p63, %p64
      %p66 = scmp.ne.s32.totalorder %s55, %s56
      %p67 = scmp.eq.s32.totalorder %s21, 0
      %p68 = por %p66, %p67
      %p69 = scmp.ne.s32.totalorder %s55, %s56
      %p70 = scmp.eq.s32.totalorder %s22, 1
      %p71 = por %p69, %p70
      %p73 = scmp.ne.s32.totalorder %s56, %s72
      %p74 = scmp.eq.s32.totalorder %s22, 0
      %p75 = por %p73, %p74
      %s77 = sadd.s32 %s76, 1
      %p80 = scmp.eq.s32.totalorder %s16, 1
      %p81 = scmp.ne.s32.totalorder %s76, %s78
      %p82 = scmp.eq.s32.totalorder %s16, 0
      %p83 = por %p81, %p82
      %p84 = scmp.ne.s32.totalorder %s76, %s78
      %p85 = scmp.eq.s32.totalorder %s21, 1
      %p86 = por %p84, %p85
      %p87 = scmp.ne.s32.totalorder %s78, %s79
      %p88 = scmp.eq.s32.totalorder %s21, 0
      %p89 = por %p87, %p88
      %p90 = scmp.ne.s32.totalorder %s78, %s79
      %p91 = scmp.eq.s32.totalorder %s22, 1
      %p92 = por %p90, %p91
      %p94 = scmp.ne.s32.totalorder %s79, %s93
      %p95 = scmp.eq.s32.totalorder %s22, 0
      %p96 = por %p94, %p95
      %s98 = sadd.s32 %s97, 1
      %p101 = scmp.eq.s32.totalorder %s16, 1
      %p102 = scmp.ne.s32.totalorder %s97, %s99
      %p103 = scmp.eq.s32.totalorder %s16, 0
      %p104 = por %p102, %p103
      %p105 = scmp.ne.s32.totalorder %s97, %s99
      %p106 = scmp.eq.s32.totalorder %s21, 1
      %p107 = por %p105, %p106
      %p108 = scmp.ne.s32.totalorder %s99, %s100
      %p109 = scmp.eq.s32.totalorder %s21, 0
      %p110 = por %p108, %p109
      %p111 = scmp.ne.s32.totalorder %s99, %s100
      %p112 = scmp.eq.s32.totalorder %s22, 1
      %p113 = por %p111, %p112
      %p115 = scmp.ne.s32.totalorder %s100, %s114
      %p116 = scmp.eq.s32.totalorder %s22, 0
      %p117 = por %p115, %p116
      %s119 = sadd.s32 %s118, 1
      %p122 = scmp.eq.s32.totalorder %s16, 1
      %p123 = scmp.ne.s32.totalorder %s118, %s120
      %p124 = scmp.eq.s32.totalorder %s16, 0
      %p125 = por %p123, %p124
      %p126 = scmp.ne.s32.totalorder %s118, %s120
      %p127 = scmp.eq.s32.totalorder %s21, 1
      %p128 = por %p126, %p127
      %p129 = scmp.ne.s32.totalorder %s120, %s121
      %p130 = scmp.eq.s32.totalorder %s21, 0
      %p131 = por %p129, %p130
      %p132 = scmp.ne.s32.totalorder %s120, %s121
      %p133 = scmp.eq.s32.totalorder %s22, 1
      %p134 = por %p132, %p133
      %p136 = scmp.ne.s32.totalorder %s121, %s135
      %p137 = scmp.eq.s32.totalorder %s22, 0
      %p138 = por %p136, %p137
      %s140 = sadd.s32 %s139, 1
      %p143 = scmp.eq.s32.totalorder %s16, 1
      %p144 = scmp.ne.s32.totalorder %s139, %s141
      %p145 = scmp.eq.s32.totalorder %s16, 0
      %p146 = por %p144, %p145
      %p147 = scmp.ne.s32.totalorder %s139, %s141
      %p148 = scmp.eq.s32.totalorder %s21, 1
      %p149 = por %p147, %p148
      %p150 = scmp.ne.s32.totalorder %s141, %s142
      %p151 = scmp.eq.s32.totalorder %s21, 0
      %p152 = por %p150, %p151
      %p153 = scmp.ne.s32.totalorder %s141, %s142
      %p154 = scmp.eq.s32.totalorder %s22, 1
      %p155 = por %p153, %p154
      %p157 = scmp.ne.s32.totalorder %s142, %s156
      %p158 = scmp.eq.s32.totalorder %s22, 0
      %p159 = por %p157, %p158
      %s161 = sadd.s32 %s160, 1
      %p164 = scmp.eq.s32.totalorder %s16, 1
      %p165 = scmp.ne.s32.totalorder %s160, %s162
      %p166 = scmp.eq.s32.totalorder %s16, 0
      %p167 = por %p165, %p166
      %p168 = scmp.ne.s32.totalorder %s160, %s162
      %p169 = scmp.eq.s32.totalorder %s21, 1
      %p170 = por %p168, %p169
      %p171 = scmp.ne.s32.totalorder %s162, %s163
      %p172 = scmp.eq.s32.totalorder %s21, 0
      %p173 = por %p171, %p172
      %p174 = scmp.ne.s32.totalorder %s162, %s163
      %p175 = scmp.eq.s32.totalorder %s22, 1
      %p176 = por %p174, %p175
      %p178 = scmp.ne.s32.totalorder %s163, %s177
      %p179 = scmp.eq.s32.totalorder %s22, 0
      %p180 = por %p178, %p179
      %s181 = ssub.s32 %s16, %s23
      %p182 = scmp.eq.s32.totalorder %s181, 0
      %s184 = sadd.s32 %s183, 1
      %s185 = scalar_select %p182, %s183, %s184
      %p188 = pneg %p182
      %p189 = scmp.eq.s32.totalorder %s16, 1
      %p190 = por %p188, %p189
      %p191 = scmp.ne.s32.totalorder %s183, %s186
      %p192 = scmp.eq.s32.totalorder %s16, 0
      %p193 = por %p191, %p192
      %p194 = scmp.ne.s32.totalorder %s183, %s186
      %p195 = scmp.eq.s32.totalorder %s21, 1
      %p196 = por %p194, %p195
      %p197 = scmp.ne.s32.totalorder %s186, %s187
      %p198 = scmp.eq.s32.totalorder %s21, 0
      %p199 = por %p197, %p198
      %p200 = scmp.ne.s32.totalorder %s186, %s187
      %p201 = scmp.eq.s32.totalorder %s22, 1
      %p202 = por %p200, %p201
      %p204 = scmp.ne.s32.totalorder %s187, %s203
      %p205 = scmp.eq.s32.totalorder %s22, 0
      %p206 = por %p204, %p205
      %p207 = scmp.le.s32.totalorder 1, %s16
      %p208 = scmp.lt.s32.totalorder %s16, 3
      %p209 = pnand %p207, %p208
      %p210 = pneg %p209
      // Predicated region
      $region9: #{tpu_custom_call.1} parent=5 // pred_check
        _
      $region10: #{tpu_custom_call.1} parent=5 // pred_check_branch
        %212 = sbr.rel (%p209) target = $region12
      $region11: #{tpu_custom_call.1} parent=5 // pred_region
        %s213 = ssub.s32 %s16, 1
        // Predicated region
        $region13: #{tpu_custom_call.1} parent=11 // pred_check
          %p214 = pneg %p89
        $region14: #{tpu_custom_call.1} parent=11 // pred_check_branch
          %216 = sbr.rel (%p214) target = $region16
        $region15: #{tpu_custom_call.1} parent=11 // pred_region
          _
        $region16: #{tpu_custom_call.1} parent=11 // pred_fallthru
          _
        // Predicated region
        $region17: #{tpu_custom_call.1} parent=11 // pred_check
          %p217 = pneg %p110
        $region18: #{tpu_custom_call.1} parent=11 // pred_check_branch
          %219 = sbr.rel (%p217) target = $region20
        $region19: #{tpu_custom_call.1} parent=11 // pred_region
          _
        $region20: #{tpu_custom_call.1} parent=11 // pred_fallthru
          _
        // Predicated region
        $region21: #{tpu_custom_call.1} parent=11 // pred_check
          %p220 = pneg %p131
        $region22: #{tpu_custom_call.1} parent=11 // pred_check_branch
          %222 = sbr.rel (%p220) target = $region24
        $region23: #{tpu_custom_call.1} parent=11 // pred_region
          _
        $region24: #{tpu_custom_call.1} parent=11 // pred_fallthru
          _
        // Predicated region
        $region25: #{tpu_custom_call.1} parent=11 // pred_check
          %p223 = pneg %p152
        $region26: #{tpu_custom_call.1} parent=11 // pred_check_branch
          %225 = sbr.rel (%p223) target = $region28
        $region27: #{tpu_custom_call.1} parent=11 // pred_region
          _
        $region28: #{tpu_custom_call.1} parent=11 // pred_fallthru
          _
        // Predicated region
        $region29: #{tpu_custom_call.1} parent=11 // pred_check
          %p226 = pneg %p173
        $region30: #{tpu_custom_call.1} parent=11 // pred_check_branch
          %228 = sbr.rel (%p226) target = $region32
        $region31: #{tpu_custom_call.1} parent=11 // pred_region
          _
        $region32: #{tpu_custom_call.1} parent=11 // pred_fallthru
          _
      $region12: #{tpu_custom_call.1} parent=5 // pred_fallthru
        _
      %p229 = scmp.lt.s32.totalorder %s16, 2
      // Predicated region
      $region33: #{tpu_custom_call.1} parent=5 // pred_check
        %p230 = pneg %p229
      $region34: #{tpu_custom_call.1} parent=5 // pred_check_branch
        %232 = sbr.rel (%p230) target = $region36
      $region35: #{tpu_custom_call.1} parent=5 // pred_region
        // Predicated region
        $region37: #{tpu_custom_call.1} parent=35 // pred_check
          %p233 = pneg %p36
        $region38: #{tpu_custom_call.1} parent=35 // pred_check_branch
          %235 = sbr.rel (%p233) target = $region40
        $region39: #{tpu_custom_call.1} parent=35 // pred_region
          %p236 = scmp.lt.s32.totalorder %s16, 1
          %s237 = scalar_select %p236, %s16, 1
          %s238 = smul.addr %s237, 2
          %s239 = smul.addr %s238, 8
          %s240 = scalar_lea.vmem %s0, %s239
        $region40: #{tpu_custom_call.1} parent=35 // pred_fallthru
          _
        // Predicated region
        $region41: #{tpu_custom_call.1} parent=35 // pred_check
          %p241 = pneg %p62
        $region42: #{tpu_custom_call.1} parent=35 // pred_check_branch
          %243 = sbr.rel (%p241) target = $region44
        $region43: #{tpu_custom_call.1} parent=35 // pred_region
          %p244 = scmp.lt.s32.totalorder %s16, 1
          %s245 = scalar_select %p244, %s16, 1
          %s246 = scalar_lea.vmem %s1, %s245
        $region44: #{tpu_custom_call.1} parent=35 // pred_fallthru
          _
      $region36: #{tpu_custom_call.1} parent=5 // pred_fallthru
        _
      %p247 = scmp.le.s32.totalorder 1, %s16
      %p248 = scmp.lt.s32.totalorder %s16, 3
      %p249 = pnand %p247, %p248
      %p250 = pneg %p249
      // Predicated region
      $region45: #{tpu_custom_call.1} parent=5 // pred_check
        _
      $region46: #{tpu_custom_call.1} parent=5 // pred_check_branch
        %252 = sbr.rel (%p249) target = $region48
      $region47: #{tpu_custom_call.1} parent=5 // pred_region
        %s253 = ssub.s32 %s16, 1
        %p254 = scmp.lt.s32.totalorder %s21, 1
        %s255 = scalar_select %p254, %s21, 1
        %s256 = smul.addr %s255, 2
        %s257 = smul.addr %s256, 8
        %s258 = scalar_lea.vmem %s0, %s257
        %p259 = pneg %p42
        %p260 = pneg %p39
        %p261 = scmp.lt.s32.totalorder %s21, 1
        %s262 = scalar_select %p261, %s21, 1
        %s263 = scalar_lea.vmem %s1, %s262
        %p264 = pneg %p68
        %p265 = pneg %p65
        %p266 = pneg %p89
        %p267 = pneg %p86
        %p268 = pneg %p110
        %p269 = pneg %p107
        %p270 = pneg %p131
        %p271 = pneg %p128
        %p272 = pneg %p152
        %p273 = pneg %p149
        %p274 = pneg %p173
        %p275 = pneg %p170
        %p276 = pneg %p199
        %p277 = pneg %p196
        %s278 = sand.u32 %s186, 1
        %s279 = scalar_lea.sflag [#allocation3], %s278
        %s280 = sand.u32 %s186, 1
        %s281 = smul.addr %s280, 16
        %s282 = scalar_lea.vmem [#allocation2], %s281
        %p283 = scmp.lt.s32.totalorder %s21, 1
        %s284 = scalar_select %p283, %s21, 1
        %s285 = smul.addr %s284, 2
        %s286 = smul.addr %s285, 8
        %s287 = scalar_lea.vmem %s0, %s286
        %p288 = scmp.lt.s32.totalorder %s21, 1
        %s289 = scalar_select %p288, %s21, 1
        %s290 = scalar_lea.vmem %s1, %s289
        %v291 = vld [vmem:[%s287] sm:$0xff]
        %v292 = vld [vmem:[%s287 + $0x8] sm:$0xff]
        %v293 = vld [vmem:[%s290] sm:$0x1]
        %v294 = vld [vmem:[%s5] sm:$0xff]
        %v295 = vld [vmem:[%s5 + $0x8] sm:$0xff]
        %s296 = scalar_lea.vmem %s5, 16
        %v297 = vld [vmem:[%s296] sm:$0xff]
        %v298 = vld [vmem:[%s296 + $0x8] sm:$0xff]
        %v299 = vld [vmem:[%s6] sm:$0xff]
        %v300 = vld [vmem:[%s6 + $0x8] sm:$0xff]
        %v301 = vld [vmem:[%s6 + $0x10] sm:$0xff]
        %v302 = vld [vmem:[%s6 + $0x18] sm:$0xff]
        %v303 = vld [vmem:[%s2] sm:$0xf]
        %vm304 = vcmask 31744
        %v306 = vsel %vm304, %v291, 0
        %v309 = vsel %vm304, %v292, 0
        %vm311 = vcmask 1043456
        %v313 = vsel %vm311, %v303, 0
        %315 = vmatprep.subr.mxu0 0.0
        %316 = vmatpush1.msra.mxu0 0.0
        %317 = vmatprep.subr.mxu0 0.0
        %318 = vmatpush1.msra.mxu0 0.0
        %319 = vmatprep.subr.mxu0 0.0
        %320 = vmatpush1.msra.mxu0 0.0
        %321 = vmatprep.subr.mxu0 0.0
        %322 = vmatpush1.msra.mxu0 0.0
        %323 = vmatprep.subr.mxu0 0.0
        %324 = vmatpush1.msra.mxu0 0.0
        %325 = vmatprep.subr.mxu0 0.0
        %326 = vmatpush1.msra.mxu0 0.0
        %327 = vmatprep.subr.mxu0 0.0
        %328 = vmatpush1.msra.mxu0 0.0
        %329 = vmatprep.subr.mxu0 0.0
        %330 = vmatpush1.msra.mxu0 0.0
        %331 = vmatprep.subr.mxu0 0.0
        %332 = vmatpush1.msra.mxu0 0.0
        %333 = vmatprep.subr.mxu0 0.0
        %334 = vmatpush1.msra.mxu0 0.0
        %335 = vmatprep.subr.mxu0 0.0
        %336 = vmatpush1.msra.mxu0 0.0
        %337 = vmatprep.subr.mxu0 0.0
        %338 = vmatpush1.msra.mxu0 0.0
        %339 = vmatprep.subr.mxu0 0.0
        %340 = vmatpush1.msra.mxu0 0.0
        %341 = vmatprep.subr.mxu0 0.0
        %342 = vmatpush1.msra.mxu0 0.0
        %343 = vmatprep.subr.mxu0 0.0
        %344 = vmatpush1.msra.mxu0 0.0
        %345 = vmatprep.subr.mxu0 0.0
        %346 = vmatpush1.msra.mxu0 %v313
        %347 = vmatprep.subr.mxu0 0.0
        %348 = vmatpush2.msra.mxu0 0.0
        %349 = vmatprep.subr.mxu0 0.0
        %350 = vmatpush2.msra.mxu0 0.0
        %351 = vmatprep.subr.mxu0 0.0
        %352 = vmatpush2.msra.mxu0 0.0
        %353 = vmatprep.subr.mxu0 0.0
        %354 = vmatpush2.msra.mxu0 0.0
        %355 = vmatprep.subr.mxu0 0.0
        %356 = vmatpush2.msra.mxu0 0.0
        %357 = vmatprep.subr.mxu0 0.0
        %358 = vmatpush2.msra.mxu0 0.0
        %359 = vmatprep.subr.mxu0 0.0
        %360 = vmatpush2.msra.mxu0 0.0
        %361 = vmatprep.subr.mxu0 0.0
        %362 = vmatpush2.msra.mxu0 0.0
        %363 = vmatprep.subr.mxu0 0.0
        %364 = vmatpush2.msra.mxu0 0.0
        %365 = vmatprep.subr.mxu0 0.0
        %366 = vmatpush2.msra.mxu0 0.0
        %367 = vmatprep.subr.mxu0 0.0
        %368 = vmatpush2.msra.mxu0 0.0
        %369 = vmatprep.subr.mxu0 0.0
        %370 = vmatpush2.msra.mxu0 0.0
        %371 = vmatprep.subr.mxu0 0.0
        %372 = vmatpush2.msra.mxu0 0.0
        %373 = vmatprep.subr.mxu0 0.0
        %374 = vmatpush2.msra.mxu0 0.0
        %375 = vmatprep.subr.mxu0 0.0
        %376 = vmatpush2.msra.mxu0 0.0
        %377 = vmatprep.subr.mxu0 0.0
        %378 = vmatpush2.msra.mxu0 0.0
        %379 = vmatprep.mubr.f32.mxu0 0.0
        %380 = vmatmul.mubr.f32.gmra.mxu0 %v306
        %v381 = vpop.f32.mrf.mxu0
        %v382 = vadd.f32 0.0, %v381
        %v383 = vpop.f32.mrf.mxu0
        %384 = vmatprep.mubr.f32.mxu0 0.0
        %385 = vmatmul.mubr.f32.gmra.mxu0 %v309
        %v386 = vpop.f32.mrf.mxu0
        %v387 = vadd.f32 0.0, %v386
        %v388 = vpop.f32.mrf.mxu0
        %389 = vdwg.mxu0
        %v390 = vld [vmem:[%s2 + $0x8] sm:$0xf]
        %v392 = vsel %vm311, %v390, 0
        %394 = vmatprep.subr.mxu0 0.0
        %395 = vmatpush1.msra.mxu0 0.0
        %396 = vmatprep.subr.mxu0 0.0
        %397 = vmatpush1.msra.mxu0 0.0
        %398 = vmatprep.subr.mxu0 0.0
        %399 = vmatpush1.msra.mxu0 0.0
        %400 = vmatprep.subr.mxu0 0.0
        %401 = vmatpush1.msra.mxu0 0.0
        %402 = vmatprep.subr.mxu0 0.0
        %403 = vmatpush1.msra.mxu0 0.0
        %404 = vmatprep.subr.mxu0 0.0
        %405 = vmatpush1.msra.mxu0 0.0
        %406 = vmatprep.subr.mxu0 0.0
        %407 = vmatpush1.msra.mxu0 0.0
        %408 = vmatprep.subr.mxu0 0.0
        %409 = vmatpush1.msra.mxu0 0.0
        %410 = vmatprep.subr.mxu0 0.0
        %411 = vmatpush1.msra.mxu0 0.0
        %412 = vmatprep.subr.mxu0 0.0
        %413 = vmatpush1.msra.mxu0 0.0
        %414 = vmatprep.subr.mxu0 0.0
        %415 = vmatpush1.msra.mxu0 0.0
        %416 = vmatprep.subr.mxu0 0.0
        %417 = vmatpush1.msra.mxu0 0.0
        %418 = vmatprep.subr.mxu0 0.0
        %419 = vmatpush1.msra.mxu0 0.0
        %420 = vmatprep.subr.mxu0 0.0
        %421 = vmatpush1.msra.mxu0 0.0
        %422 = vmatprep.subr.mxu0 0.0
        %423 = vmatpush1.msra.mxu0 0.0
        %424 = vmatprep.subr.mxu0 0.0
        %425 = vmatpush1.msra.mxu0 %v392
        %426 = vmatprep.subr.mxu0 0.0
        %427 = vmatpush2.msra.mxu0 0.0
        %428 = vmatprep.subr.mxu0 0.0
        %429 = vmatpush2.msra.mxu0 0.0
        %430 = vmatprep.subr.mxu0 0.0
        %431 = vmatpush2.msra.mxu0 0.0
        %432 = vmatprep.subr.mxu0 0.0
        %433 = vmatpush2.msra.mxu0 0.0
        %434 = vmatprep.subr.mxu0 0.0
        %435 = vmatpush2.msra.mxu0 0.0
        %436 = vmatprep.subr.mxu0 0.0
        %437 = vmatpush2.msra.mxu0 0.0
        %438 = vmatprep.subr.mxu0 0.0
        %439 = vmatpush2.msra.mxu0 0.0
        %440 = vmatprep.subr.mxu0 0.0
        %441 = vmatpush2.msra.mxu0 0.0
        %442 = vmatprep.subr.mxu0 0.0
        %443 = vmatpush2.msra.mxu0 0.0
        %444 = vmatprep.subr.mxu0 0.0
        %445 = vmatpush2.msra.mxu0 0.0
        %446 = vmatprep.subr.mxu0 0.0
        %447 = vmatpush2.msra.mxu0 0.0
        %448 = vmatprep.subr.mxu0 0.0
        %449 = vmatpush2.msra.mxu0 0.0
        %450 = vmatprep.subr.mxu0 0.0
        %451 = vmatpush2.msra.mxu0 0.0
        %452 = vmatprep.subr.mxu0 0.0
        %453 = vmatpush2.msra.mxu0 0.0
        %454 = vmatprep.subr.mxu0 0.0
        %455 = vmatpush2.msra.mxu0 0.0
        %456 = vmatprep.subr.mxu0 0.0
        %457 = vmatpush2.msra.mxu0 0.0
        %458 = vmatprep.mubr.f32.mxu0 0.0
        %459 = vmatmul.mubr.f32.gmra.mxu0 %v306
        %v460 = vpop.f32.mrf.mxu0
        %v461 = vadd.f32 0.0, %v460
        %v462 = vpop.f32.mrf.mxu0
        %463 = vmatprep.mubr.f32.mxu0 0.0
        %464 = vmatmul.mubr.f32.gmra.mxu0 %v309
        %v465 = vpop.f32.mrf.mxu0
        %v466 = vadd.f32 0.0, %v465
        %v467 = vpop.f32.mrf.mxu0
        %468 = vdwg.mxu0
        %v469 = vld [vmem:[%s2 + $0x10] sm:$0xf]
        %v471 = vsel %vm311, %v469, 0
        %473 = vmatprep.subr.mxu0 0.0
        %474 = vmatpush1.msra.mxu0 0.0
        %475 = vmatprep.subr.mxu0 0.0
        %476 = vmatpush1.msra.mxu0 0.0
        %477 = vmatprep.subr.mxu0 0.0
        %478 = vmatpush1.msra.mxu0 0.0
        %479 = vmatprep.subr.mxu0 0.0
        %480 = vmatpush1.msra.mxu0 0.0
        %481 = vmatprep.subr.mxu0 0.0
        %482 = vmatpush1.msra.mxu0 0.0
        %483 = vmatprep.subr.mxu0 0.0
        %484 = vmatpush1.msra.mxu0 0.0
        %485 = vmatprep.subr.mxu0 0.0
        %486 = vmatpush1.msra.mxu0 0.0
        %487 = vmatprep.subr.mxu0 0.0
        %488 = vmatpush1.msra.mxu0 0.0
        %489 = vmatprep.subr.mxu0 0.0
        %490 = vmatpush1.msra.mxu0 0.0
        %491 = vmatprep.subr.mxu0 0.0
        %492 = vmatpush1.msra.mxu0 0.0
        %493 = vmatprep.subr.mxu0 0.0
        %494 = vmatpush1.msra.mxu0 0.0
        %495 = vmatprep.subr.mxu0 0.0
        %496 = vmatpush1.msra.mxu0 0.0
        %497 = vmatprep.subr.mxu0 0.0
        %498 = vmatpush1.msra.mxu0 0.0
        %499 = vmatprep.subr.mxu0 0.0
        %500 = vmatpush1.msra.mxu0 0.0
        %501 = vmatprep.subr.mxu0 0.0
        %502 = vmatpush1.msra.mxu0 0.0
        %503 = vmatprep.subr.mxu0 0.0
        %504 = vmatpush1.msra.mxu0 %v471
        %505 = vmatprep.subr.mxu0 0.0
        %506 = vmatpush2.msra.mxu0 0.0
        %507 = vmatprep.subr.mxu0 0.0
        %508 = vmatpush2.msra.mxu0 0.0
        %509 = vmatprep.subr.mxu0 0.0
        %510 = vmatpush2.msra.mxu0 0.0
        %511 = vmatprep.subr.mxu0 0.0
        %512 = vmatpush2.msra.mxu0 0.0
        %513 = vmatprep.subr.mxu0 0.0
        %514 = vmatpush2.msra.mxu0 0.0
        %515 = vmatprep.subr.mxu0 0.0
        %516 = vmatpush2.msra.mxu0 0.0
        %517 = vmatprep.subr.mxu0 0.0
        %518 = vmatpush2.msra.mxu0 0.0
        %519 = vmatprep.subr.mxu0 0.0
        %520 = vmatpush2.msra.mxu0 0.0
        %521 = vmatprep.subr.mxu0 0.0
        %522 = vmatpush2.msra.mxu0 0.0
        %523 = vmatprep.subr.mxu0 0.0
        %524 = vmatpush2.msra.mxu0 0.0
        %525 = vmatprep.subr.mxu0 0.0
        %526 = vmatpush2.msra.mxu0 0.0
        %527 = vmatprep.subr.mxu0 0.0
        %528 = vmatpush2.msra.mxu0 0.0
        %529 = vmatprep.subr.mxu0 0.0
        %530 = vmatpush2.msra.mxu0 0.0
        %531 = vmatprep.subr.mxu0 0.0
        %532 = vmatpush2.msra.mxu0 0.0
        %533 = vmatprep.subr.mxu0 0.0
        %534 = vmatpush2.msra.mxu0 0.0
        %535 = vmatprep.subr.mxu0 0.0
        %536 = vmatpush2.msra.mxu0 0.0
        %537 = vmatprep.mubr.f32.mxu0 0.0
        %538 = vmatmul.mubr.f32.gmra.mxu0 %v306
        %v539 = vpop.f32.mrf.mxu0
        %v540 = vadd.f32 0.0, %v539
        %v541 = vpop.f32.mrf.mxu0
        %542 = vmatprep.mubr.f32.mxu0 0.0
        %543 = vmatmul.mubr.f32.gmra.mxu0 %v309
        %v544 = vpop.f32.mrf.mxu0
        %v545 = vadd.f32 0.0, %v544
        %v546 = vpop.f32.mrf.mxu0
        %547 = vdwg.mxu0
        %vm548 = vcmask 130048
        %v550 = vsel %vm548, %v294, 0
        %v553 = vsel %vm548, %v295, 0
        %555 = vmatprep.subr.mxu0 0.0
        %556 = vmatpush1.msra.mxu0 0.0
        %557 = vmatprep.subr.mxu0 0.0
        %558 = vmatpush1.msra.mxu0 0.0
        %559 = vmatprep.subr.mxu0 0.0
        %560 = vmatpush1.msra.mxu0 0.0
        %561 = vmatprep.subr.mxu0 0.0
        %562 = vmatpush1.msra.mxu0 0.0
        %563 = vmatprep.subr.mxu0 0.0
        %564 = vmatpush1.msra.mxu0 0.0
        %565 = vmatprep.subr.mxu0 0.0
        %566 = vmatpush1.msra.mxu0 0.0
        %567 = vmatprep.subr.mxu0 0.0
        %568 = vmatpush1.msra.mxu0 0.0
        %569 = vmatprep.subr.mxu0 0.0
        %570 = vmatpush1.msra.mxu0 0.0
        %571 = vmatprep.subr.mxu0 0.0
        %572 = vmatpush1.msra.mxu0 0.0
        %573 = vmatprep.subr.mxu0 0.0
        %574 = vmatpush1.msra.mxu0 0.0
        %575 = vmatprep.subr.mxu0 0.0
        %576 = vmatpush1.msra.mxu0 0.0
        %577 = vmatprep.subr.mxu0 0.0
        %578 = vmatpush1.msra.mxu0 0.0
        %579 = vmatprep.subr.mxu0 0.0
        %580 = vmatpush1.msra.mxu0 0.0
        %581 = vmatprep.subr.mxu0 0.0
        %582 = vmatpush1.msra.mxu0 0.0
        %583 = vmatprep.subr.mxu0 0.0
        %584 = vmatpush1.msra.mxu0 %v387
        %585 = vmatprep.subr.mxu0 0.0
        %586 = vmatpush1.msra.mxu0 %v382
        %587 = vmatprep.subr.mxu0 0.0
        %588 = vmatpush2.msra.mxu0 0.0
        %589 = vmatprep.subr.mxu0 0.0
        %590 = vmatpush2.msra.mxu0 0.0
        %591 = vmatprep.subr.mxu0 0.0
        %592 = vmatpush2.msra.mxu0 0.0
        %593 = vmatprep.subr.mxu0 0.0
        %594 = vmatpush2.msra.mxu0 0.0
        %595 = vmatprep.subr.mxu0 0.0
        %596 = vmatpush2.msra.mxu0 0.0
        %597 = vmatprep.subr.mxu0 0.0
        %598 = vmatpush2.msra.mxu0 0.0
        %599 = vmatprep.subr.mxu0 0.0
        %600 = vmatpush2.msra.mxu0 0.0
        %601 = vmatprep.subr.mxu0 0.0
        %602 = vmatpush2.msra.mxu0 0.0
        %603 = vmatprep.subr.mxu0 0.0
        %604 = vmatpush2.msra.mxu0 0.0
        %605 = vmatprep.subr.mxu0 0.0
        %606 = vmatpush2.msra.mxu0 0.0
        %607 = vmatprep.subr.mxu0 0.0
        %608 = vmatpush2.msra.mxu0 0.0
        %609 = vmatprep.subr.mxu0 0.0
        %610 = vmatpush2.msra.mxu0 0.0
        %611 = vmatprep.subr.mxu0 0.0
        %612 = vmatpush2.msra.mxu0 0.0
        %613 = vmatprep.subr.mxu0 0.0
        %614 = vmatpush2.msra.mxu0 0.0
        %615 = vmatprep.subr.mxu0 0.0
        %616 = vmatpush2.msra.mxu0 0.0
        %617 = vmatprep.subr.mxu0 0.0
        %618 = vmatpush2.msra.mxu0 0.0
        %619 = vmatprep.mubr.f32.mxu0 0.0
        %620 = vmatmul.mubr.f32.gmra.mxu0 %v550
        %v621 = vpop.f32.mrf.mxu0
        %v622 = vadd.f32 %v461, %v621
        %v623 = vpop.f32.mrf.mxu0
        %624 = vmatprep.mubr.f32.mxu0 0.0
        %625 = vmatmul.mubr.f32.gmra.mxu0 %v553
        %v626 = vpop.f32.mrf.mxu0
        %v627 = vadd.f32 %v466, %v626
        %v628 = vpop.f32.mrf.mxu0
        %629 = vdwg.mxu0
        %v631 = vsel %vm548, %v297, 0
        %v634 = vsel %vm548, %v298, 0
        %636 = vmatprep.subr.mxu0 0.0
        %637 = vmatpush1.msra.mxu0 0.0
        %638 = vmatprep.subr.mxu0 0.0
        %639 = vmatpush1.msra.mxu0 0.0
        %640 = vmatprep.subr.mxu0 0.0
        %641 = vmatpush1.msra.mxu0 0.0
        %642 = vmatprep.subr.mxu0 0.0
        %643 = vmatpush1.msra.mxu0 0.0
        %644 = vmatprep.subr.mxu0 0.0
        %645 = vmatpush1.msra.mxu0 0.0
        %646 = vmatprep.subr.mxu0 0.0
        %647 = vmatpush1.msra.mxu0 0.0
        %648 = vmatprep.subr.mxu0 0.0
        %649 = vmatpush1.msra.mxu0 0.0
        %650 = vmatprep.subr.mxu0 0.0
        %651 = vmatpush1.msra.mxu0 0.0
        %652 = vmatprep.subr.mxu0 0.0
        %653 = vmatpush1.msra.mxu0 0.0
        %654 = vmatprep.subr.mxu0 0.0
        %655 = vmatpush1.msra.mxu0 0.0
        %656 = vmatprep.subr.mxu0 0.0
        %657 = vmatpush1.msra.mxu0 0.0
        %658 = vmatprep.subr.mxu0 0.0
        %659 = vmatpush1.msra.mxu0 0.0
        %660 = vmatprep.subr.mxu0 0.0
        %661 = vmatpush1.msra.mxu0 0.0
        %662 = vmatprep.subr.mxu0 0.0
        %663 = vmatpush1.msra.mxu0 0.0
        %664 = vmatprep.subr.mxu0 0.0
        %665 = vmatpush1.msra.mxu0 %v545
        %666 = vmatprep.subr.mxu0 0.0
        %667 = vmatpush1.msra.mxu0 %v540
        %668 = vmatprep.subr.mxu0 0.0
        %669 = vmatpush2.msra.mxu0 0.0
        %670 = vmatprep.subr.mxu0 0.0
        %671 = vmatpush2.msra.mxu0 0.0
        %672 = vmatprep.subr.mxu0 0.0
        %673 = vmatpush2.msra.mxu0 0.0
        %674 = vmatprep.subr.mxu0 0.0
        %675 = vmatpush2.msra.mxu0 0.0
        %676 = vmatprep.subr.mxu0 0.0
        %677 = vmatpush2.msra.mxu0 0.0
        %678 = vmatprep.subr.mxu0 0.0
        %679 = vmatpush2.msra.mxu0 0.0
        %680 = vmatprep.subr.mxu0 0.0
        %681 = vmatpush2.msra.mxu0 0.0
        %682 = vmatprep.subr.mxu0 0.0
        %683 = vmatpush2.msra.mxu0 0.0
        %684 = vmatprep.subr.mxu0 0.0
        %685 = vmatpush2.msra.mxu0 0.0
        %686 = vmatprep.subr.mxu0 0.0
        %687 = vmatpush2.msra.mxu0 0.0
        %688 = vmatprep.subr.mxu0 0.0
        %689 = vmatpush2.msra.mxu0 0.0
        %690 = vmatprep.subr.mxu0 0.0
        %691 = vmatpush2.msra.mxu0 0.0
        %692 = vmatprep.subr.mxu0 0.0
        %693 = vmatpush2.msra.mxu0 0.0
        %694 = vmatprep.subr.mxu0 0.0
        %695 = vmatpush2.msra.mxu0 0.0
        %696 = vmatprep.subr.mxu0 0.0
        %697 = vmatpush2.msra.mxu0 0.0
        %698 = vmatprep.subr.mxu0 0.0
        %699 = vmatpush2.msra.mxu0 0.0
        %700 = vmatprep.mubr.f32.mxu0 0.0
        %701 = vmatmul.mubr.f32.gmra.mxu0 %v631
        %v702 = vpop.f32.mrf.mxu0
        %v703 = vadd.f32 0.0, %v702
        %v704 = vpop.f32.mrf.mxu0
        %705 = vmatprep.mubr.f32.mxu0 0.0
        %706 = vmatmul.mubr.f32.gmra.mxu0 %v634
        %v707 = vpop.f32.mrf.mxu0
        %v708 = vadd.f32 0.0, %v707
        %v709 = vpop.f32.mrf.mxu0
        %710 = vdwg.mxu0
        %v711 = vadd.f32 %v622, %v703
        %v712 = vadd.f32 %v627, %v708
        %v713 = vld [vmem:[%s4] sm:$0x1]
        %v714 = vlaneseq
        %v715 = vshrl.u32 %v714, 7
        %v716 = vsub.s32 0, %v715
        %v717 = vrot.slane %v713, %v716
        %v718 = vadd.f32 %v711, %v717
        %v719 = vadd.f32 %v712, %v717
        %v720 = vld [vmem:[%s4 + $0x1] sm:$0x1]
        %v721 = vld [vmem:[%s4 + $0x2] sm:$0x1]
        %vm722 = vcmask 261120
        %v723 = vsel %vm722, %v718, 0.0
        %v724 = vsel %vm722, %v719, 0.0
        %v725 = vadd.f32 %v723, %v724
        %v726 = vrot.slane %v725, 4
        %v727 = vadd.f32 %v725, %v726
        %v728 = vrot.slane %v727, 2
        %v729 = vadd.f32 %v727, %v728
        %v730 = vrot.slane %v729, 1
        %v731 = vadd.f32 %v729, %v730
        %v732 = vmul.f32 %v718, %v718
        %v733 = vmul.f32 %v719, %v719
        %v734 = vsel %vm722, %v732, 0.0
        %v735 = vsel %vm722, %v733, 0.0
        %v736 = vadd.f32 %v734, %v735
        %v737 = vrot.slane %v736, 4
        %v738 = vadd.f32 %v736, %v737
        %v739 = vrot.slane %v738, 2
        %v740 = vadd.f32 %v738, %v739
        %v741 = vrot.slane %v740, 1
        %v742 = vadd.f32 %v740, %v741
        %v744 = vsel %vm722, %v731, 0
        %746 = vmatprep.subr.mxu0 0.0
        %747 = vmatpush1.msra.mxu0 0.0
        %748 = vmatprep.subr.mxu0 0.0
        %749 = vmatpush1.msra.mxu0 0.0
        %750 = vmatprep.subr.mxu0 0.0
        %751 = vmatpush1.msra.mxu0 0.0
        %752 = vmatprep.subr.mxu0 0.0
        %753 = vmatpush1.msra.mxu0 0.0
        %754 = vmatprep.subr.mxu0 0.0
        %755 = vmatpush1.msra.mxu0 0.0
        %756 = vmatprep.subr.mxu0 0.0
        %757 = vmatpush1.msra.mxu0 0.0
        %758 = vmatprep.subr.mxu0 0.0
        %759 = vmatpush1.msra.mxu0 0.0
        %760 = vmatprep.subr.mxu0 0.0
        %761 = vmatpush1.msra.mxu0 0.0
        %762 = vmatprep.subr.mxu0 0.0
        %763 = vmatpush1.msra.mxu0 0.0
        %764 = vmatprep.subr.mxu0 0.0
        %765 = vmatpush1.msra.mxu0 0.0
        %766 = vmatprep.subr.mxu0 0.0
        %767 = vmatpush1.msra.mxu0 0.0
        %768 = vmatprep.subr.mxu0 0.0
        %769 = vmatpush1.msra.mxu0 0.0
        %770 = vmatprep.subr.mxu0 0.0
        %771 = vmatpush1.msra.mxu0 %v302
        %772 = vmatprep.subr.mxu0 0.0
        %773 = vmatpush1.msra.mxu0 %v301
        %774 = vmatprep.subr.mxu0 0.0
        %775 = vmatpush1.msra.mxu0 %v300
        %776 = vmatprep.subr.mxu0 0.0
        %777 = vmatpush1.msra.mxu0 %v299
        %778 = vmatprep.subr.mxu0 0.0
        %779 = vmatpush2.msra.mxu0 0.0
        %780 = vmatprep.subr.mxu0 0.0
        %781 = vmatpush2.msra.mxu0 0.0
        %782 = vmatprep.subr.mxu0 0.0
        %783 = vmatpush2.msra.mxu0 0.0
        %784 = vmatprep.subr.mxu0 0.0
        %785 = vmatpush2.msra.mxu0 0.0
        %786 = vmatprep.subr.mxu0 0.0
        %787 = vmatpush2.msra.mxu0 0.0
        %788 = vmatprep.subr.mxu0 0.0
        %789 = vmatpush2.msra.mxu0 0.0
        %790 = vmatprep.subr.mxu0 0.0
        %791 = vmatpush2.msra.mxu0 0.0
        %792 = vmatprep.subr.mxu0 0.0
        %793 = vmatpush2.msra.mxu0 0.0
        %794 = vmatprep.subr.mxu0 0.0
        %795 = vmatpush2.msra.mxu0 0.0
        %796 = vmatprep.subr.mxu0 0.0
        %797 = vmatpush2.msra.mxu0 0.0
        %798 = vmatprep.subr.mxu0 0.0
        %799 = vmatpush2.msra.mxu0 0.0
        %800 = vmatprep.subr.mxu0 0.0
        %801 = vmatpush2.msra.mxu0 0.0
        %802 = vmatprep.subr.mxu0 0.0
        %803 = vmatpush2.msra.mxu0 0.0
        %804 = vmatprep.subr.mxu0 0.0
        %805 = vmatpush2.msra.mxu0 0.0
        %806 = vmatprep.subr.mxu0 0.0
        %807 = vmatpush2.msra.mxu0 0.0
        %808 = vmatprep.subr.mxu0 0.0
        %809 = vmatpush2.msra.mxu0 0.0
        %810 = vmatprep.mubr.f32.mxu0 0.0
        %811 = vmatmul.mubr.f32.gmra.mxu0 %v744
        %v812 = vpop.f32.mrf.mxu0
        %v813 = vadd.f32 0.0, %v812
        %v814 = vpop.f32.mrf.mxu0
        %815 = vdwg.mxu0
        %v817 = vsel %vm722, %v742, 0
        %819 = vmatprep.subr.mxu0 0.0
        %820 = vmatpush1.msra.mxu0 0.0
        %821 = vmatprep.subr.mxu0 0.0
        %822 = vmatpush1.msra.mxu0 0.0
        %823 = vmatprep.subr.mxu0 0.0
        %824 = vmatpush1.msra.mxu0 0.0
        %825 = vmatprep.subr.mxu0 0.0
        %826 = vmatpush1.msra.mxu0 0.0
        %827 = vmatprep.subr.mxu0 0.0
        %828 = vmatpush1.msra.mxu0 0.0
        %829 = vmatprep.subr.mxu0 0.0
        %830 = vmatpush1.msra.mxu0 0.0
        %831 = vmatprep.subr.mxu0 0.0
        %832 = vmatpush1.msra.mxu0 0.0
        %833 = vmatprep.subr.mxu0 0.0
        %834 = vmatpush1.msra.mxu0 0.0
        %835 = vmatprep.subr.mxu0 0.0
        %836 = vmatpush1.msra.mxu0 0.0
        %837 = vmatprep.subr.mxu0 0.0
        %838 = vmatpush1.msra.mxu0 0.0
        %839 = vmatprep.subr.mxu0 0.0
        %840 = vmatpush1.msra.mxu0 0.0
        %841 = vmatprep.subr.mxu0 0.0
        %842 = vmatpush1.msra.mxu0 0.0
        %843 = vmatprep.subr.mxu0 0.0
        %844 = vmatpush1.msra.mxu0 %v302
        %845 = vmatprep.subr.mxu0 0.0
        %846 = vmatpush1.msra.mxu0 %v301
        %847 = vmatprep.subr.mxu0 0.0
        %848 = vmatpush1.msra.mxu0 %v300
        %849 = vmatprep.subr.mxu0 0.0
        %850 = vmatpush1.msra.mxu0 %v299
        %851 = vmatprep.subr.mxu0 0.0
        %852 = vmatpush2.msra.mxu0 0.0
        %853 = vmatprep.subr.mxu0 0.0
        %854 = vmatpush2.msra.mxu0 0.0
        %855 = vmatprep.subr.mxu0 0.0
        %856 = vmatpush2.msra.mxu0 0.0
        %857 = vmatprep.subr.mxu0 0.0
        %858 = vmatpush2.msra.mxu0 0.0
        %859 = vmatprep.subr.mxu0 0.0
        %860 = vmatpush2.msra.mxu0 0.0
        %861 = vmatprep.subr.mxu0 0.0
        %862 = vmatpush2.msra.mxu0 0.0
        %863 = vmatprep.subr.mxu0 0.0
        %864 = vmatpush2.msra.mxu0 0.0
        %865 = vmatprep.subr.mxu0 0.0
        %866 = vmatpush2.msra.mxu0 0.0
        %867 = vmatprep.subr.mxu0 0.0
        %868 = vmatpush2.msra.mxu0 0.0
        %869 = vmatprep.subr.mxu0 0.0
        %870 = vmatpush2.msra.mxu0 0.0
        %871 = vmatprep.subr.mxu0 0.0
        %872 = vmatpush2.msra.mxu0 0.0
        %873 = vmatprep.subr.mxu0 0.0
        %874 = vmatpush2.msra.mxu0 0.0
        %875 = vmatprep.subr.mxu0 0.0
        %876 = vmatpush2.msra.mxu0 0.0
        %877 = vmatprep.subr.mxu0 0.0
        %878 = vmatpush2.msra.mxu0 0.0
        %879 = vmatprep.subr.mxu0 0.0
        %880 = vmatpush2.msra.mxu0 0.0
        %881 = vmatprep.subr.mxu0 0.0
        %882 = vmatpush2.msra.mxu0 0.0
        %883 = vmatprep.mubr.f32.mxu0 0.0
        %884 = vmatmul.mubr.f32.gmra.mxu0 %v817
        %v885 = vpop.f32.mrf.mxu0
        %v886 = vadd.f32 0.0, %v885
        %v887 = vpop.f32.mrf.mxu0
        %888 = vdwg.mxu0
        %v889 = vmul.f32 %v813, %v813
        %v890 = vsub.f32 %v886, %v889
        %v891 = vlaneseq
        %v892 = vshrl.u32 %v891, 7
        %v893 = vsub.s32 0, %v892
        %v894 = vrot.slane %v813, %v893
        %v895 = vsub.f32 %v718, %v894
        %v896 = vsub.f32 %v719, %v894
        %v897 = vadd.f32 %v890, 1e-05
        %v898 = vrsqrt.pop %v897
        %v899 = vlaneseq
        %v900 = vshrl.u32 %v899, 7
        %v901 = vsub.s32 0, %v900
        %v902 = vrot.slane %v898, %v901
        %v903 = vmul.f32 %v895, %v902
        %v904 = vmul.f32 %v896, %v902
        %v905 = vlaneseq
        %v906 = vshrl.u32 %v905, 7
        %v907 = vsub.s32 0, %v906
        %v908 = vrot.slane %v720, %v907
        %v909 = vmul.f32 %v903, %v908
        %v910 = vmul.f32 %v904, %v908
        %v911 = vlaneseq
        %v912 = vshrl.u32 %v911, 7
        %v913 = vsub.s32 0, %v912
        %v914 = vrot.slane %v721, %v913
        %v915 = vadd.f32 %v909, %v914
        %v916 = vadd.f32 %v910, %v914
        %v917 = vmax.f32 %v915, 0.0
        %v918 = vmax.f32 %v916, 0.0
        %v919 = vand.u32 2147483647, %v915
        %v920 = vand.u32 2147483647, %v916
        %v921 = vsub.f32 0.0, %v919
        %v922 = vsub.f32 0.0, %v920
        %v923 = vmul.f32 %v921, 1.442695
        %v924 = vpow.pop %v923
        %v925 = vmul.f32 %v922, 1.442695
        %v926 = vpow.pop %v925
        %v927 = vadd.f32 %v924, 1.0
        %v928 = vadd.f32 %v926, 1.0
        %v929 = vlog2.pop %v927
        %v930 = vmul.f32 %v929, 0.6931472
        %v931 = vlog2.pop %v928
        %v932 = vmul.f32 %v931, 0.6931472
        %v933 = vadd.f32 %v917, %v930
        %v934 = vadd.f32 %v918, %v932
        %v935 = vtanh.pop %v933
        %v936 = vtanh.pop %v934
        %v937 = vmul.f32 %v915, %v935
        %v938 = vmul.f32 %v916, %v936
        %v939 = vmax.f32 %v293, 0.0
        %v940 = vand.u32 2147483647, %v293
        %v941 = vsub.f32 0.0, %v940
        %v942 = vmul.f32 %v941, 1.442695
        %v943 = vpow.pop %v942
        %v944 = vadd.f32 %v943, 1.0
        %v945 = vlog2.pop %v944
        %v946 = vmul.f32 %v945, 0.6931472
        %v947 = vadd.f32 %v939, %v946
        %v948 = vtanh.pop %v947
        %v949 = vmul.f32 %v293, %v948
        %v950 = vld [vmem:[%s2 + $0x20] sm:$0xff]
        %v951 = vld [vmem:[%s4 + $0x3] sm:$0x1]
        %vm952 = vcmask 64512
        %v954 = vsel %vm952, %v949, 0
        %956 = vmatprep.subr.mxu0 0.0
        %957 = vmatpush1.msra.mxu0 0.0
        %958 = vmatprep.subr.mxu0 0.0
        %959 = vmatpush1.msra.mxu0 0.0
        %960 = vmatprep.subr.mxu0 0.0
        %961 = vmatpush1.msra.mxu0 0.0
        %962 = vmatprep.subr.mxu0 0.0
        %963 = vmatpush1.msra.mxu0 0.0
        %964 = vmatprep.subr.mxu0 0.0
        %965 = vmatpush1.msra.mxu0 0.0
        %966 = vmatprep.subr.mxu0 0.0
        %967 = vmatpush1.msra.mxu0 0.0
        %968 = vmatprep.subr.mxu0 0.0
        %969 = vmatpush1.msra.mxu0 0.0
        %970 = vmatprep.subr.mxu0 0.0
        %971 = vmatpush1.msra.mxu0 0.0
        %972 = vmatprep.subr.mxu0 0.0
        %973 = vmatpush1.msra.mxu0 0.0
        %974 = vmatprep.subr.mxu0 0.0
        %975 = vmatpush1.msra.mxu0 0.0
        %976 = vmatprep.subr.mxu0 0.0
        %977 = vmatpush1.msra.mxu0 0.0
        %978 = vmatprep.subr.mxu0 0.0
        %979 = vmatpush1.msra.mxu0 0.0
        %980 = vmatprep.subr.mxu0 0.0
        %981 = vmatpush1.msra.mxu0 0.0
        %982 = vmatprep.subr.mxu0 0.0
        %983 = vmatpush1.msra.mxu0 0.0
        %984 = vmatprep.subr.mxu0 0.0
        %985 = vmatpush1.msra.mxu0 0.0
        %986 = vmatprep.subr.mxu0 0.0
        %987 = vmatpush1.msra.mxu0 %v950
        %988 = vmatprep.subr.mxu0 0.0
        %989 = vmatpush2.msra.mxu0 0.0
        %990 = vmatprep.subr.mxu0 0.0
        %991 = vmatpush2.msra.mxu0 0.0
        %992 = vmatprep.subr.mxu0 0.0
        %993 = vmatpush2.msra.mxu0 0.0
        %994 = vmatprep.subr.mxu0 0.0
        %995 = vmatpush2.msra.mxu0 0.0
        %996 = vmatprep.subr.mxu0 0.0
        %997 = vmatpush2.msra.mxu0 0.0
        %998 = vmatprep.subr.mxu0 0.0
        %999 = vmatpush2.msra.mxu0 0.0
        %1000 = vmatprep.subr.mxu0 0.0
        %1001 = vmatpush2.msra.mxu0 0.0
        %1002 = vmatprep.subr.mxu0 0.0
        %1003 = vmatpush2.msra.mxu0 0.0
        %1004 = vmatprep.subr.mxu0 0.0
        %1005 = vmatpush2.msra.mxu0 0.0
        %1006 = vmatprep.subr.mxu0 0.0
        %1007 = vmatpush2.msra.mxu0 0.0
        %1008 = vmatprep.subr.mxu0 0.0
        %1009 = vmatpush2.msra.mxu0 0.0
        %1010 = vmatprep.subr.mxu0 0.0
        %1011 = vmatpush2.msra.mxu0 0.0
        %1012 = vmatprep.subr.mxu0 0.0
        %1013 = vmatpush2.msra.mxu0 0.0
        %1014 = vmatprep.subr.mxu0 0.0
        %1015 = vmatpush2.msra.mxu0 0.0
        %1016 = vmatprep.subr.mxu0 0.0
        %1017 = vmatpush2.msra.mxu0 0.0
        %1018 = vmatprep.subr.mxu0 0.0
        %1019 = vmatpush2.msra.mxu0 0.0
        %1020 = vmatprep.mubr.f32.mxu0 0.0
        %1021 = vmatmul.mubr.f32.gmra.mxu0 %v954
        %v1022 = vpop.f32.mrf.mxu0
        %v1023 = vadd.f32 %v951, %v1022
        %v1024 = vpop.f32.mrf.mxu0
        %1025 = vdwg.mxu0
        %v1026 = vlaneseq
        %v1027 = vshrl.u32 %v1026, 7
        %v1028 = vsub.s32 0, %v1027
        %v1029 = vrot.slane %v1023, %v1028
        %v1030 = vadd.f32 %v937, %v1029
        %v1031 = vadd.f32 %v938, %v1029
        %v1032 = vld [vmem:[%s3] sm:$0xff]
        %v1033 = vld [vmem:[%s3 + $0x8] sm:$0xff]
        %v1034 = vld [vmem:[%s3 + $0x10] sm:$0xff]
        %v1035 = vld [vmem:[%s3 + $0x18] sm:$0xff]
        %v1037 = vsel %vm722, %v1030, 0
        %v1040 = vsel %vm722, %v1031, 0
        %1042 = vmatprep.subr.mxu0 0.0
        %1043 = vmatpush1.msra.mxu0 0.0
        %1044 = vmatprep.subr.mxu0 0.0
        %1045 = vmatpush1.msra.mxu0 0.0
        %1046 = vmatprep.subr.mxu0 0.0
        %1047 = vmatpush1.msra.mxu0 0.0
        %1048 = vmatprep.subr.mxu0 0.0
        %1049 = vmatpush1.msra.mxu0 0.0
        %1050 = vmatprep.subr.mxu0 0.0
        %1051 = vmatpush1.msra.mxu0 0.0
        %1052 = vmatprep.subr.mxu0 0.0
        %1053 = vmatpush1.msra.mxu0 0.0
        %1054 = vmatprep.subr.mxu0 0.0
        %1055 = vmatpush1.msra.mxu0 0.0
        %1056 = vmatprep.subr.mxu0 0.0
        %1057 = vmatpush1.msra.mxu0 0.0
        %1058 = vmatprep.subr.mxu0 0.0
        %1059 = vmatpush1.msra.mxu0 0.0
        %1060 = vmatprep.subr.mxu0 0.0
        %1061 = vmatpush1.msra.mxu0 0.0
        %1062 = vmatprep.subr.mxu0 0.0
        %1063 = vmatpush1.msra.mxu0 0.0
        %1064 = vmatprep.subr.mxu0 0.0
        %1065 = vmatpush1.msra.mxu0 0.0
        %1066 = vmatprep.subr.mxu0 0.0
        %1067 = vmatpush1.msra.mxu0 %v1035
        %1068 = vmatprep.subr.mxu0 0.0
        %1069 = vmatpush1.msra.mxu0 %v1034
        %1070 = vmatprep.subr.mxu0 0.0
        %1071 = vmatpush1.msra.mxu0 %v1033
        %1072 = vmatprep.subr.mxu0 0.0
        %1073 = vmatpush1.msra.mxu0 %v1032
        %1074 = vmatprep.subr.mxu0 0.0
        %1075 = vmatpush2.msra.mxu0 0.0
        %1076 = vmatprep.subr.mxu0 0.0
        %1077 = vmatpush2.msra.mxu0 0.0
        %1078 = vmatprep.subr.mxu0 0.0
        %1079 = vmatpush2.msra.mxu0 0.0
        %1080 = vmatprep.subr.mxu0 0.0
        %1081 = vmatpush2.msra.mxu0 0.0
        %1082 = vmatprep.subr.mxu0 0.0
        %1083 = vmatpush2.msra.mxu0 0.0
        %1084 = vmatprep.subr.mxu0 0.0
        %1085 = vmatpush2.msra.mxu0 0.0
        %1086 = vmatprep.subr.mxu0 0.0
        %1087 = vmatpush2.msra.mxu0 0.0
        %1088 = vmatprep.subr.mxu0 0.0
        %1089 = vmatpush2.msra.mxu0 0.0
        %1090 = vmatprep.subr.mxu0 0.0
        %1091 = vmatpush2.msra.mxu0 0.0
        %1092 = vmatprep.subr.mxu0 0.0
        %1093 = vmatpush2.msra.mxu0 0.0
        %1094 = vmatprep.subr.mxu0 0.0
        %1095 = vmatpush2.msra.mxu0 0.0
        %1096 = vmatprep.subr.mxu0 0.0
        %1097 = vmatpush2.msra.mxu0 0.0
        %1098 = vmatprep.subr.mxu0 0.0
        %1099 = vmatpush2.msra.mxu0 0.0
        %1100 = vmatprep.subr.mxu0 0.0
        %1101 = vmatpush2.msra.mxu0 0.0
        %1102 = vmatprep.subr.mxu0 0.0
        %1103 = vmatpush2.msra.mxu0 0.0
        %1104 = vmatprep.subr.mxu0 0.0
        %1105 = vmatpush2.msra.mxu0 0.0
        %1106 = vmatprep.mubr.f32.mxu0 0.0
        %1107 = vmatmul.mubr.f32.gmra.mxu0 %v1037
        %v1108 = vpop.f32.mrf.mxu0
        %v1109 = vadd.f32 0.0, %v1108
        %v1110 = vpop.f32.mrf.mxu0
        %1111 = vmatprep.mubr.f32.mxu0 0.0
        %1112 = vmatmul.mubr.f32.gmra.mxu0 %v1040
        %v1113 = vpop.f32.mrf.mxu0
        %v1114 = vadd.f32 0.0, %v1113
        %v1115 = vpop.f32.mrf.mxu0
        %1116 = vdwg.mxu0
        %v1117 = vld [vmem:[%s3 + $0x20] sm:$0xff]
        %v1118 = vld [vmem:[%s3 + $0x28] sm:$0xff]
        %v1119 = vld [vmem:[%s3 + $0x30] sm:$0xff]
        %v1120 = vld [vmem:[%s3 + $0x38] sm:$0xff]
        %1121 = vmatprep.subr.mxu0 0.0
        %1122 = vmatpush1.msra.mxu0 0.0
        %1123 = vmatprep.subr.mxu0 0.0
        %1124 = vmatpush1.msra.mxu0 0.0
        %1125 = vmatprep.subr.mxu0 0.0
        %1126 = vmatpush1.msra.mxu0 0.0
        %1127 = vmatprep.subr.mxu0 0.0
        %1128 = vmatpush1.msra.mxu0 0.0
        %1129 = vmatprep.subr.mxu0 0.0
        %1130 = vmatpush1.msra.mxu0 0.0
        %1131 = vmatprep.subr.mxu0 0.0
        %1132 = vmatpush1.msra.mxu0 0.0
        %1133 = vmatprep.subr.mxu0 0.0
        %1134 = vmatpush1.msra.mxu0 0.0
        %1135 = vmatprep.subr.mxu0 0.0
        %1136 = vmatpush1.msra.mxu0 0.0
        %1137 = vmatprep.subr.mxu0 0.0
        %1138 = vmatpush1.msra.mxu0 0.0
        %1139 = vmatprep.subr.mxu0 0.0
        %1140 = vmatpush1.msra.mxu0 0.0
        %1141 = vmatprep.subr.mxu0 0.0
        %1142 = vmatpush1.msra.mxu0 0.0
        %1143 = vmatprep.subr.mxu0 0.0
        %1144 = vmatpush1.msra.mxu0 0.0
        %1145 = vmatprep.subr.mxu0 0.0
        %1146 = vmatpush1.msra.mxu0 %v1120
        %1147 = vmatprep.subr.mxu0 0.0
        %1148 = vmatpush1.msra.mxu0 %v1119
        %1149 = vmatprep.subr.mxu0 0.0
        %1150 = vmatpush1.msra.mxu0 %v1118
        %1151 = vmatprep.subr.mxu0 0.0
        %1152 = vmatpush1.msra.mxu0 %v1117
        %1153 = vmatprep.subr.mxu0 0.0
        %1154 = vmatpush2.msra.mxu0 0.0
        %1155 = vmatprep.subr.mxu0 0.0
        %1156 = vmatpush2.msra.mxu0 0.0
        %1157 = vmatprep.subr.mxu0 0.0
        %1158 = vmatpush2.msra.mxu0 0.0
        %1159 = vmatprep.subr.mxu0 0.0
        %1160 = vmatpush2.msra.mxu0 0.0
        %1161 = vmatprep.subr.mxu0 0.0
        %1162 = vmatpush2.msra.mxu0 0.0
        %1163 = vmatprep.subr.mxu0 0.0
        %1164 = vmatpush2.msra.mxu0 0.0
        %1165 = vmatprep.subr.mxu0 0.0
        %1166 = vmatpush2.msra.mxu0 0.0
        %1167 = vmatprep.subr.mxu0 0.0
        %1168 = vmatpush2.msra.mxu0 0.0
        %1169 = vmatprep.subr.mxu0 0.0
        %1170 = vmatpush2.msra.mxu0 0.0
        %1171 = vmatprep.subr.mxu0 0.0
        %1172 = vmatpush2.msra.mxu0 0.0
        %1173 = vmatprep.subr.mxu0 0.0
        %1174 = vmatpush2.msra.mxu0 0.0
        %1175 = vmatprep.subr.mxu0 0.0
        %1176 = vmatpush2.msra.mxu0 0.0
        %1177 = vmatprep.subr.mxu0 0.0
        %1178 = vmatpush2.msra.mxu0 0.0
        %1179 = vmatprep.subr.mxu0 0.0
        %1180 = vmatpush2.msra.mxu0 0.0
        %1181 = vmatprep.subr.mxu0 0.0
        %1182 = vmatpush2.msra.mxu0 0.0
        %1183 = vmatprep.subr.mxu0 0.0
        %1184 = vmatpush2.msra.mxu0 0.0
        %1185 = vmatprep.mubr.f32.mxu0 0.0
        %1186 = vmatmul.mubr.f32.gmra.mxu0 %v1037
        %v1187 = vpop.f32.mrf.mxu0
        %v1188 = vadd.f32 0.0, %v1187
        %v1189 = vpop.f32.mrf.mxu0
        %1190 = vmatprep.mubr.f32.mxu0 0.0
        %1191 = vmatmul.mubr.f32.gmra.mxu0 %v1040
        %v1192 = vpop.f32.mrf.mxu0
        %v1193 = vadd.f32 0.0, %v1192
        %v1194 = vpop.f32.mrf.mxu0
        %1195 = vdwg.mxu0
        %v1196 = vld [vmem:[%s3 + $0x40] sm:$0xff]
        %v1197 = vld [vmem:[%s3 + $0x48] sm:$0xff]
        %v1198 = vld [vmem:[%s3 + $0x50] sm:$0xff]
        %v1199 = vld [vmem:[%s3 + $0x58] sm:$0xff]
        %1200 = vmatprep.subr.mxu0 0.0
        %1201 = vmatpush1.msra.mxu0 0.0
        %1202 = vmatprep.subr.mxu0 0.0
        %1203 = vmatpush1.msra.mxu0 0.0
        %1204 = vmatprep.subr.mxu0 0.0
        %1205 = vmatpush1.msra.mxu0 0.0
        %1206 = vmatprep.subr.mxu0 0.0
        %1207 = vmatpush1.msra.mxu0 0.0
        %1208 = vmatprep.subr.mxu0 0.0
        %1209 = vmatpush1.msra.mxu0 0.0
        %1210 = vmatprep.subr.mxu0 0.0
        %1211 = vmatpush1.msra.mxu0 0.0
        %1212 = vmatprep.subr.mxu0 0.0
        %1213 = vmatpush1.msra.mxu0 0.0
        %1214 = vmatprep.subr.mxu0 0.0
        %1215 = vmatpush1.msra.mxu0 0.0
        %1216 = vmatprep.subr.mxu0 0.0
        %1217 = vmatpush1.msra.mxu0 0.0
        %1218 = vmatprep.subr.mxu0 0.0
        %1219 = vmatpush1.msra.mxu0 0.0
        %1220 = vmatprep.subr.mxu0 0.0
        %1221 = vmatpush1.msra.mxu0 0.0
        %1222 = vmatprep.subr.mxu0 0.0
        %1223 = vmatpush1.msra.mxu0 0.0
        %1224 = vmatprep.subr.mxu0 0.0
        %1225 = vmatpush1.msra.mxu0 %v1199
        %1226 = vmatprep.subr.mxu0 0.0
        %1227 = vmatpush1.msra.mxu0 %v1198
        %1228 = vmatprep.subr.mxu0 0.0
        %1229 = vmatpush1.msra.mxu0 %v1197
        %1230 = vmatprep.subr.mxu0 0.0
        %1231 = vmatpush1.msra.mxu0 %v1196
        %1232 = vmatprep.subr.mxu0 0.0
        %1233 = vmatpush2.msra.mxu0 0.0
        %1234 = vmatprep.subr.mxu0 0.0
        %1235 = vmatpush2.msra.mxu0 0.0
        %1236 = vmatprep.subr.mxu0 0.0
        %1237 = vmatpush2.msra.mxu0 0.0
        %1238 = vmatprep.subr.mxu0 0.0
        %1239 = vmatpush2.msra.mxu0 0.0
        %1240 = vmatprep.subr.mxu0 0.0
        %1241 = vmatpush2.msra.mxu0 0.0
        %1242 = vmatprep.subr.mxu0 0.0
        %1243 = vmatpush2.msra.mxu0 0.0
        %1244 = vmatprep.subr.mxu0 0.0
        %1245 = vmatpush2.msra.mxu0 0.0
        %1246 = vmatprep.subr.mxu0 0.0
        %1247 = vmatpush2.msra.mxu0 0.0
        %1248 = vmatprep.subr.mxu0 0.0
        %1249 = vmatpush2.msra.mxu0 0.0
        %1250 = vmatprep.subr.mxu0 0.0
        %1251 = vmatpush2.msra.mxu0 0.0
        %1252 = vmatprep.subr.mxu0 0.0
        %1253 = vmatpush2.msra.mxu0 0.0
        %1254 = vmatprep.subr.mxu0 0.0
        %1255 = vmatpush2.msra.mxu0 0.0
        %1256 = vmatprep.subr.mxu0 0.0
        %1257 = vmatpush2.msra.mxu0 0.0
        %1258 = vmatprep.subr.mxu0 0.0
        %1259 = vmatpush2.msra.mxu0 0.0
        %1260 = vmatprep.subr.mxu0 0.0
        %1261 = vmatpush2.msra.mxu0 0.0
        %1262 = vmatprep.subr.mxu0 0.0
        %1263 = vmatpush2.msra.mxu0 0.0
        %1264 = vmatprep.mubr.f32.mxu0 0.0
        %1265 = vmatmul.mubr.f32.gmra.mxu0 %v1037
        %v1266 = vpop.f32.mrf.mxu0
        %v1267 = vadd.f32 0.0, %v1266
        %v1268 = vpop.f32.mrf.mxu0
        %1269 = vmatprep.mubr.f32.mxu0 0.0
        %1270 = vmatmul.mubr.f32.gmra.mxu0 %v1040
        %v1271 = vpop.f32.mrf.mxu0
        %v1272 = vadd.f32 0.0, %v1271
        %v1273 = vpop.f32.mrf.mxu0
        %1274 = vdwg.mxu0
        %1275 = vmatprep.subr.mxu0 0.0
        %1276 = vmatpush1.msra.mxu0 0.0
        %1277 = vmatprep.subr.mxu0 0.0
        %1278 = vmatpush1.msra.mxu0 0.0
        %1279 = vmatprep.subr.mxu0 0.0
        %1280 = vmatpush1.msra.mxu0 0.0
        %1281 = vmatprep.subr.mxu0 0.0
        %1282 = vmatpush1.msra.mxu0 0.0
        %1283 = vmatprep.subr.mxu0 0.0
        %1284 = vmatpush1.msra.mxu0 0.0
        %1285 = vmatprep.subr.mxu0 0.0
        %1286 = vmatpush1.msra.mxu0 0.0
        %1287 = vmatprep.subr.mxu0 0.0
        %1288 = vmatpush1.msra.mxu0 0.0
        %1289 = vmatprep.subr.mxu0 0.0
        %1290 = vmatpush1.msra.mxu0 0.0
        %1291 = vmatprep.subr.mxu0 0.0
        %1292 = vmatpush1.msra.mxu0 0.0
        %1293 = vmatprep.subr.mxu0 0.0
        %1294 = vmatpush1.msra.mxu0 0.0
        %1295 = vmatprep.subr.mxu0 0.0
        %1296 = vmatpush1.msra.mxu0 0.0
        %1297 = vmatprep.subr.mxu0 0.0
        %1298 = vmatpush1.msra.mxu0 0.0
        %1299 = vmatprep.subr.mxu0 0.0
        %1300 = vmatpush1.msra.mxu0 0.0
        %1301 = vmatprep.subr.mxu0 0.0
        %1302 = vmatpush1.msra.mxu0 0.0
        %1303 = vmatprep.subr.mxu0 0.0
        %1304 = vmatpush1.msra.mxu0 %v1114
        %1305 = vmatprep.subr.mxu0 0.0
        %1306 = vmatpush1.msra.mxu0 %v1109
        %1307 = vmatprep.subr.mxu0 0.0
        %1308 = vmatpush2.msra.mxu0 0.0
        %1309 = vmatprep.subr.mxu0 0.0
        %1310 = vmatpush2.msra.mxu0 0.0
        %1311 = vmatprep.subr.mxu0 0.0
        %1312 = vmatpush2.msra.mxu0 0.0
        %1313 = vmatprep.subr.mxu0 0.0
        %1314 = vmatpush2.msra.mxu0 0.0
        %1315 = vmatprep.subr.mxu0 0.0
        %1316 = vmatpush2.msra.mxu0 0.0
        %1317 = vmatprep.subr.mxu0 0.0
        %1318 = vmatpush2.msra.mxu0 0.0
        %1319 = vmatprep.subr.mxu0 0.0
        %1320 = vmatpush2.msra.mxu0 0.0
        %1321 = vmatprep.subr.mxu0 0.0
        %1322 = vmatpush2.msra.mxu0 0.0
        %1323 = vmatprep.subr.mxu0 0.0
        %1324 = vmatpush2.msra.mxu0 0.0
        %1325 = vmatprep.subr.mxu0 0.0
        %1326 = vmatpush2.msra.mxu0 0.0
        %1327 = vmatprep.subr.mxu0 0.0
        %1328 = vmatpush2.msra.mxu0 0.0
        %1329 = vmatprep.subr.mxu0 0.0
        %1330 = vmatpush2.msra.mxu0 0.0
        %1331 = vmatprep.subr.mxu0 0.0
        %1332 = vmatpush2.msra.mxu0 0.0
        %1333 = vmatprep.subr.mxu0 0.0
        %1334 = vmatpush2.msra.mxu0 0.0
        %1335 = vmatprep.subr.mxu0 0.0
        %1336 = vmatpush2.msra.mxu0 0.0
        %1337 = vmatprep.subr.mxu0 0.0
        %1338 = vmatpush2.msra.mxu0 0.0
        %1339 = vmatprep.mubr.f32.mxu0 0.0
        %1340 = vmatmul.mubr.f32.gmra.mxu0 %v550
        %v1341 = vpop.f32.mrf.mxu0
        %v1342 = vadd.f32 %v1188, %v1341
        %v1343 = vpop.f32.mrf.mxu0
        %1344 = vmatprep.mubr.f32.mxu0 0.0
        %1345 = vmatmul.mubr.f32.gmra.mxu0 %v553
        %v1346 = vpop.f32.mrf.mxu0
        %v1347 = vadd.f32 %v1193, %v1346
        %v1348 = vpop.f32.mrf.mxu0
        %1349 = vdwg.mxu0
        %1350 = vmatprep.subr.mxu0 0.0
        %1351 = vmatpush1.msra.mxu0 0.0
        %1352 = vmatprep.subr.mxu0 0.0
        %1353 = vmatpush1.msra.mxu0 0.0
        %1354 = vmatprep.subr.mxu0 0.0
        %1355 = vmatpush1.msra.mxu0 0.0
        %1356 = vmatprep.subr.mxu0 0.0
        %1357 = vmatpush1.msra.mxu0 0.0
        %1358 = vmatprep.subr.mxu0 0.0
        %1359 = vmatpush1.msra.mxu0 0.0
        %1360 = vmatprep.subr.mxu0 0.0
        %1361 = vmatpush1.msra.mxu0 0.0
        %1362 = vmatprep.subr.mxu0 0.0
        %1363 = vmatpush1.msra.mxu0 0.0
        %1364 = vmatprep.subr.mxu0 0.0
        %1365 = vmatpush1.msra.mxu0 0.0
        %1366 = vmatprep.subr.mxu0 0.0
        %1367 = vmatpush1.msra.mxu0 0.0
        %1368 = vmatprep.subr.mxu0 0.0
        %1369 = vmatpush1.msra.mxu0 0.0
        %1370 = vmatprep.subr.mxu0 0.0
        %1371 = vmatpush1.msra.mxu0 0.0
        %1372 = vmatprep.subr.mxu0 0.0
        %1373 = vmatpush1.msra.mxu0 0.0
        %1374 = vmatprep.subr.mxu0 0.0
        %1375 = vmatpush1.msra.mxu0 0.0
        %1376 = vmatprep.subr.mxu0 0.0
        %1377 = vmatpush1.msra.mxu0 0.0
        %1378 = vmatprep.subr.mxu0 0.0
        %1379 = vmatpush1.msra.mxu0 %v1272
        %1380 = vmatprep.subr.mxu0 0.0
        %1381 = vmatpush1.msra.mxu0 %v1267
        %1382 = vmatprep.subr.mxu0 0.0
        %1383 = vmatpush2.msra.mxu0 0.0
        %1384 = vmatprep.subr.mxu0 0.0
        %1385 = vmatpush2.msra.mxu0 0.0
        %1386 = vmatprep.subr.mxu0 0.0
        %1387 = vmatpush2.msra.mxu0 0.0
        %1388 = vmatprep.subr.mxu0 0.0
        %1389 = vmatpush2.msra.mxu0 0.0
        %1390 = vmatprep.subr.mxu0 0.0
        %1391 = vmatpush2.msra.mxu0 0.0
        %1392 = vmatprep.subr.mxu0 0.0
        %1393 = vmatpush2.msra.mxu0 0.0
        %1394 = vmatprep.subr.mxu0 0.0
        %1395 = vmatpush2.msra.mxu0 0.0
        %1396 = vmatprep.subr.mxu0 0.0
        %1397 = vmatpush2.msra.mxu0 0.0
        %1398 = vmatprep.subr.mxu0 0.0
        %1399 = vmatpush2.msra.mxu0 0.0
        %1400 = vmatprep.subr.mxu0 0.0
        %1401 = vmatpush2.msra.mxu0 0.0
        %1402 = vmatprep.subr.mxu0 0.0
        %1403 = vmatpush2.msra.mxu0 0.0
        %1404 = vmatprep.subr.mxu0 0.0
        %1405 = vmatpush2.msra.mxu0 0.0
        %1406 = vmatprep.subr.mxu0 0.0
        %1407 = vmatpush2.msra.mxu0 0.0
        %1408 = vmatprep.subr.mxu0 0.0
        %1409 = vmatpush2.msra.mxu0 0.0
        %1410 = vmatprep.subr.mxu0 0.0
        %1411 = vmatpush2.msra.mxu0 0.0
        %1412 = vmatprep.subr.mxu0 0.0
        %1413 = vmatpush2.msra.mxu0 0.0
        %1414 = vmatprep.mubr.f32.mxu0 0.0
        %1415 = vmatmul.mubr.f32.gmra.mxu0 %v631
        %v1416 = vpop.f32.mrf.mxu0
        %v1417 = vadd.f32 0.0, %v1416
        %v1418 = vpop.f32.mrf.mxu0
        %1419 = vmatprep.mubr.f32.mxu0 0.0
        %1420 = vmatmul.mubr.f32.gmra.mxu0 %v634
        %v1421 = vpop.f32.mrf.mxu0
        %v1422 = vadd.f32 0.0, %v1421
        %v1423 = vpop.f32.mrf.mxu0
        %1424 = vdwg.mxu0
        %v1425 = vadd.f32 %v1342, %v1417
        %v1426 = vadd.f32 %v1347, %v1422
        %v1427 = vld [vmem:[%s4 + $0x4] sm:$0x1]
        %v1428 = vlaneseq
        %v1429 = vshrl.u32 %v1428, 7
        %v1430 = vsub.s32 0, %v1429
        %v1431 = vrot.slane %v1427, %v1430
        %v1432 = vadd.f32 %v1425, %v1431
        %v1433 = vadd.f32 %v1426, %v1431
        %v1434 = vld [vmem:[%s4 + $0x5] sm:$0x1]
        %v1435 = vld [vmem:[%s4 + $0x6] sm:$0x1]
        %v1436 = vsel %vm722, %v1432, 0.0
        %v1437 = vsel %vm722, %v1433, 0.0
        %v1438 = vadd.f32 %v1436, %v1437
        %v1439 = vrot.slane %v1438, 4
        %v1440 = vadd.f32 %v1438, %v1439
        %v1441 = vrot.slane %v1440, 2
        %v1442 = vadd.f32 %v1440, %v1441
        %v1443 = vrot.slane %v1442, 1
        %v1444 = vadd.f32 %v1442, %v1443
        %v1445 = vmul.f32 %v1432, %v1432
        %v1446 = vmul.f32 %v1433, %v1433
        %v1447 = vsel %vm722, %v1445, 0.0
        %v1448 = vsel %vm722, %v1446, 0.0
        %v1449 = vadd.f32 %v1447, %v1448
        %v1450 = vrot.slane %v1449, 4
        %v1451 = vadd.f32 %v1449, %v1450
        %v1452 = vrot.slane %v1451, 2
        %v1453 = vadd.f32 %v1451, %v1452
        %v1454 = vrot.slane %v1453, 1
        %v1455 = vadd.f32 %v1453, %v1454
        %v1457 = vsel %vm722, %v1444, 0
        %1459 = vmatprep.subr.mxu0 0.0
        %1460 = vmatpush1.msra.mxu0 0.0
        %1461 = vmatprep.subr.mxu0 0.0
        %1462 = vmatpush1.msra.mxu0 0.0
        %1463 = vmatprep.subr.mxu0 0.0
        %1464 = vmatpush1.msra.mxu0 0.0
        %1465 = vmatprep.subr.mxu0 0.0
        %1466 = vmatpush1.msra.mxu0 0.0
        %1467 = vmatprep.subr.mxu0 0.0
        %1468 = vmatpush1.msra.mxu0 0.0
        %1469 = vmatprep.subr.mxu0 0.0
        %1470 = vmatpush1.msra.mxu0 0.0
        %1471 = vmatprep.subr.mxu0 0.0
        %1472 = vmatpush1.msra.mxu0 0.0
        %1473 = vmatprep.subr.mxu0 0.0
        %1474 = vmatpush1.msra.mxu0 0.0
        %1475 = vmatprep.subr.mxu0 0.0
        %1476 = vmatpush1.msra.mxu0 0.0
        %1477 = vmatprep.subr.mxu0 0.0
        %1478 = vmatpush1.msra.mxu0 0.0
        %1479 = vmatprep.subr.mxu0 0.0
        %1480 = vmatpush1.msra.mxu0 0.0
        %1481 = vmatprep.subr.mxu0 0.0
        %1482 = vmatpush1.msra.mxu0 0.0
        %1483 = vmatprep.subr.mxu0 0.0
        %1484 = vmatpush1.msra.mxu0 %v302
        %1485 = vmatprep.subr.mxu0 0.0
        %1486 = vmatpush1.msra.mxu0 %v301
        %1487 = vmatprep.subr.mxu0 0.0
        %1488 = vmatpush1.msra.mxu0 %v300
        %1489 = vmatprep.subr.mxu0 0.0
        %1490 = vmatpush1.msra.mxu0 %v299
        %1491 = vmatprep.subr.mxu0 0.0
        %1492 = vmatpush2.msra.mxu0 0.0
        %1493 = vmatprep.subr.mxu0 0.0
        %1494 = vmatpush2.msra.mxu0 0.0
        %1495 = vmatprep.subr.mxu0 0.0
        %1496 = vmatpush2.msra.mxu0 0.0
        %1497 = vmatprep.subr.mxu0 0.0
        %1498 = vmatpush2.msra.mxu0 0.0
        %1499 = vmatprep.subr.mxu0 0.0
        %1500 = vmatpush2.msra.mxu0 0.0
        %1501 = vmatprep.subr.mxu0 0.0
        %1502 = vmatpush2.msra.mxu0 0.0
        %1503 = vmatprep.subr.mxu0 0.0
        %1504 = vmatpush2.msra.mxu0 0.0
        %1505 = vmatprep.subr.mxu0 0.0
        %1506 = vmatpush2.msra.mxu0 0.0
        %1507 = vmatprep.subr.mxu0 0.0
        %1508 = vmatpush2.msra.mxu0 0.0
        %1509 = vmatprep.subr.mxu0 0.0
        %1510 = vmatpush2.msra.mxu0 0.0
        %1511 = vmatprep.subr.mxu0 0.0
        %1512 = vmatpush2.msra.mxu0 0.0
        %1513 = vmatprep.subr.mxu0 0.0
        %1514 = vmatpush2.msra.mxu0 0.0
        %1515 = vmatprep.subr.mxu0 0.0
        %1516 = vmatpush2.msra.mxu0 0.0
        %1517 = vmatprep.subr.mxu0 0.0
        %1518 = vmatpush2.msra.mxu0 0.0
        %1519 = vmatprep.subr.mxu0 0.0
        %1520 = vmatpush2.msra.mxu0 0.0
        %1521 = vmatprep.subr.mxu0 0.0
        %1522 = vmatpush2.msra.mxu0 0.0
        %1523 = vmatprep.mubr.f32.mxu0 0.0
        %1524 = vmatmul.mubr.f32.gmra.mxu0 %v1457
        %v1525 = vpop.f32.mrf.mxu0
        %v1526 = vadd.f32 0.0, %v1525
        %v1527 = vpop.f32.mrf.mxu0
        %1528 = vdwg.mxu0
        %v1530 = vsel %vm722, %v1455, 0
        %1532 = vmatprep.subr.mxu0 0.0
        %1533 = vmatpush1.msra.mxu0 0.0
        %1534 = vmatprep.subr.mxu0 0.0
        %1535 = vmatpush1.msra.mxu0 0.0
        %1536 = vmatprep.subr.mxu0 0.0
        %1537 = vmatpush1.msra.mxu0 0.0
        %1538 = vmatprep.subr.mxu0 0.0
        %1539 = vmatpush1.msra.mxu0 0.0
        %1540 = vmatprep.subr.mxu0 0.0
        %1541 = vmatpush1.msra.mxu0 0.0
        %1542 = vmatprep.subr.mxu0 0.0
        %1543 = vmatpush1.msra.mxu0 0.0
        %1544 = vmatprep.subr.mxu0 0.0
        %1545 = vmatpush1.msra.mxu0 0.0
        %1546 = vmatprep.subr.mxu0 0.0
        %1547 = vmatpush1.msra.mxu0 0.0
        %1548 = vmatprep.subr.mxu0 0.0
        %1549 = vmatpush1.msra.mxu0 0.0
        %1550 = vmatprep.subr.mxu0 0.0
        %1551 = vmatpush1.msra.mxu0 0.0
        %1552 = vmatprep.subr.mxu0 0.0
        %1553 = vmatpush1.msra.mxu0 0.0
        %1554 = vmatprep.subr.mxu0 0.0
        %1555 = vmatpush1.msra.mxu0 0.0
        %1556 = vmatprep.subr.mxu0 0.0
        %1557 = vmatpush1.msra.mxu0 %v302
        %1558 = vmatprep.subr.mxu0 0.0
        %1559 = vmatpush1.msra.mxu0 %v301
        %1560 = vmatprep.subr.mxu0 0.0
        %1561 = vmatpush1.msra.mxu0 %v300
        %1562 = vmatprep.subr.mxu0 0.0
        %1563 = vmatpush1.msra.mxu0 %v299
        %1564 = vmatprep.subr.mxu0 0.0
        %1565 = vmatpush2.msra.mxu0 0.0
        %1566 = vmatprep.subr.mxu0 0.0
        %1567 = vmatpush2.msra.mxu0 0.0
        %1568 = vmatprep.subr.mxu0 0.0
        %1569 = vmatpush2.msra.mxu0 0.0
        %1570 = vmatprep.subr.mxu0 0.0
        %1571 = vmatpush2.msra.mxu0 0.0
        %1572 = vmatprep.subr.mxu0 0.0
        %1573 = vmatpush2.msra.mxu0 0.0
        %1574 = vmatprep.subr.mxu0 0.0
        %1575 = vmatpush2.msra.mxu0 0.0
        %1576 = vmatprep.subr.mxu0 0.0
        %1577 = vmatpush2.msra.mxu0 0.0
        %1578 = vmatprep.subr.mxu0 0.0
        %1579 = vmatpush2.msra.mxu0 0.0
        %1580 = vmatprep.subr.mxu0 0.0
        %1581 = vmatpush2.msra.mxu0 0.0
        %1582 = vmatprep.subr.mxu0 0.0
        %1583 = vmatpush2.msra.mxu0 0.0
        %1584 = vmatprep.subr.mxu0 0.0
        %1585 = vmatpush2.msra.mxu0 0.0
        %1586 = vmatprep.subr.mxu0 0.0
        %1587 = vmatpush2.msra.mxu0 0.0
        %1588 = vmatprep.subr.mxu0 0.0
        %1589 = vmatpush2.msra.mxu0 0.0
        %1590 = vmatprep.subr.mxu0 0.0
        %1591 = vmatpush2.msra.mxu0 0.0
        %1592 = vmatprep.subr.mxu0 0.0
        %1593 = vmatpush2.msra.mxu0 0.0
        %1594 = vmatprep.subr.mxu0 0.0
        %1595 = vmatpush2.msra.mxu0 0.0
        %1596 = vmatprep.mubr.f32.mxu0 0.0
        %1597 = vmatmul.mubr.f32.gmra.mxu0 %v1530
        %v1598 = vpop.f32.mrf.mxu0
        %v1599 = vadd.f32 0.0, %v1598
        %v1600 = vpop.f32.mrf.mxu0
        %1601 = vdwg.mxu0
        %v1602 = vmul.f32 %v1526, %v1526
        %v1603 = vsub.f32 %v1599, %v1602
        %v1604 = vlaneseq
        %v1605 = vshrl.u32 %v1604, 7
        %v1606 = vsub.s32 0, %v1605
        %v1607 = vrot.slane %v1526, %v1606
        %v1608 = vsub.f32 %v1432, %v1607
        %v1609 = vsub.f32 %v1433, %v1607
        %v1610 = vadd.f32 %v1603, 1e-05
        %v1611 = vrsqrt.pop %v1610
        %v1612 = vlaneseq
        %v1613 = vshrl.u32 %v1612, 7
        %v1614 = vsub.s32 0, %v1613
        %v1615 = vrot.slane %v1611, %v1614
        %v1616 = vmul.f32 %v1608, %v1615
        %v1617 = vmul.f32 %v1609, %v1615
        %v1618 = vlaneseq
        %v1619 = vshrl.u32 %v1618, 7
        %v1620 = vsub.s32 0, %v1619
        %v1621 = vrot.slane %v1434, %v1620
        %v1622 = vmul.f32 %v1616, %v1621
        %v1623 = vmul.f32 %v1617, %v1621
        %v1624 = vlaneseq
        %v1625 = vshrl.u32 %v1624, 7
        %v1626 = vsub.s32 0, %v1625
        %v1627 = vrot.slane %v1435, %v1626
        %v1628 = vadd.f32 %v1622, %v1627
        %v1629 = vadd.f32 %v1623, %v1627
        %v1630 = vmax.f32 %v1628, 0.0
        %v1631 = vmax.f32 %v1629, 0.0
        %v1632 = vand.u32 2147483647, %v1628
        %v1633 = vand.u32 2147483647, %v1629
        %v1634 = vsub.f32 0.0, %v1632
        %v1635 = vsub.f32 0.0, %v1633
        %v1636 = vmul.f32 %v1634, 1.442695
        %v1637 = vpow.pop %v1636
        %v1638 = vmul.f32 %v1635, 1.442695
        %v1639 = vpow.pop %v1638
        %v1640 = vadd.f32 %v1637, 1.0
        %v1641 = vadd.f32 %v1639, 1.0
        %v1642 = vlog2.pop %v1640
        %v1643 = vmul.f32 %v1642, 0.6931472
        %v1644 = vlog2.pop %v1641
        %v1645 = vmul.f32 %v1644, 0.6931472
        %v1646 = vadd.f32 %v1630, %v1643
        %v1647 = vadd.f32 %v1631, %v1645
        %v1648 = vtanh.pop %v1646
        %v1649 = vtanh.pop %v1647
        %v1650 = vmul.f32 %v1628, %v1648
        %v1651 = vmul.f32 %v1629, %v1649
        %v1652 = vld [vmem:[%s2 + $0x18] sm:$0xf]
        %v1653 = vld [vmem:[%s4 + $0x7] sm:$0x1]
        %v1654 = vlaneseq
        %v1655 = vshrl.u32 %v1654, 7
        %v1656 = vsub.s32 0, %v1655
        %v1657 = vrot.slane %v1653, %v1656
        %v1659 = vsel %vm311, %v1652, 0
        %1661 = vmatprep.subr.mxu0 0.0
        %1662 = vmatpush1.msra.mxu0 0.0
        %1663 = vmatprep.subr.mxu0 0.0
        %1664 = vmatpush1.msra.mxu0 0.0
        %1665 = vmatprep.subr.mxu0 0.0
        %1666 = vmatpush1.msra.mxu0 0.0
        %1667 = vmatprep.subr.mxu0 0.0
        %1668 = vmatpush1.msra.mxu0 0.0
        %1669 = vmatprep.subr.mxu0 0.0
        %1670 = vmatpush1.msra.mxu0 0.0
        %1671 = vmatprep.subr.mxu0 0.0
        %1672 = vmatpush1.msra.mxu0 0.0
        %1673 = vmatprep.subr.mxu0 0.0
        %1674 = vmatpush1.msra.mxu0 0.0
        %1675 = vmatprep.subr.mxu0 0.0
        %1676 = vmatpush1.msra.mxu0 0.0
        %1677 = vmatprep.subr.mxu0 0.0
        %1678 = vmatpush1.msra.mxu0 0.0
        %1679 = vmatprep.subr.mxu0 0.0
        %1680 = vmatpush1.msra.mxu0 0.0
        %1681 = vmatprep.subr.mxu0 0.0
        %1682 = vmatpush1.msra.mxu0 0.0
        %1683 = vmatprep.subr.mxu0 0.0
        %1684 = vmatpush1.msra.mxu0 0.0
        %1685 = vmatprep.subr.mxu0 0.0
        %1686 = vmatpush1.msra.mxu0 0.0
        %1687 = vmatprep.subr.mxu0 0.0
        %1688 = vmatpush1.msra.mxu0 0.0
        %1689 = vmatprep.subr.mxu0 0.0
        %1690 = vmatpush1.msra.mxu0 0.0
        %1691 = vmatprep.subr.mxu0 0.0
        %1692 = vmatpush1.msra.mxu0 %v1659
        %1693 = vmatprep.subr.mxu0 0.0
        %1694 = vmatpush2.msra.mxu0 0.0
        %1695 = vmatprep.subr.mxu0 0.0
        %1696 = vmatpush2.msra.mxu0 0.0
        %1697 = vmatprep.subr.mxu0 0.0
        %1698 = vmatpush2.msra.mxu0 0.0
        %1699 = vmatprep.subr.mxu0 0.0
        %1700 = vmatpush2.msra.mxu0 0.0
        %1701 = vmatprep.subr.mxu0 0.0
        %1702 = vmatpush2.msra.mxu0 0.0
        %1703 = vmatprep.subr.mxu0 0.0
        %1704 = vmatpush2.msra.mxu0 0.0
        %1705 = vmatprep.subr.mxu0 0.0
        %1706 = vmatpush2.msra.mxu0 0.0
        %1707 = vmatprep.subr.mxu0 0.0
        %1708 = vmatpush2.msra.mxu0 0.0
        %1709 = vmatprep.subr.mxu0 0.0
        %1710 = vmatpush2.msra.mxu0 0.0
        %1711 = vmatprep.subr.mxu0 0.0
        %1712 = vmatpush2.msra.mxu0 0.0
        %1713 = vmatprep.subr.mxu0 0.0
        %1714 = vmatpush2.msra.mxu0 0.0
        %1715 = vmatprep.subr.mxu0 0.0
        %1716 = vmatpush2.msra.mxu0 0.0
        %1717 = vmatprep.subr.mxu0 0.0
        %1718 = vmatpush2.msra.mxu0 0.0
        %1719 = vmatprep.subr.mxu0 0.0
        %1720 = vmatpush2.msra.mxu0 0.0
        %1721 = vmatprep.subr.mxu0 0.0
        %1722 = vmatpush2.msra.mxu0 0.0
        %1723 = vmatprep.subr.mxu0 0.0
        %1724 = vmatpush2.msra.mxu0 0.0
        %1725 = vmatprep.mubr.f32.mxu0 0.0
        %1726 = vmatmul.mubr.f32.gmra.mxu0 %v306
        %v1727 = vpop.f32.mrf.mxu0
        %v1728 = vadd.f32 %v1657, %v1727
        %v1729 = vpop.f32.mrf.mxu0
        %1730 = vmatprep.mubr.f32.mxu0 0.0
        %1731 = vmatmul.mubr.f32.gmra.mxu0 %v309
        %v1732 = vpop.f32.mrf.mxu0
        %v1733 = vadd.f32 %v1657, %v1732
        %v1734 = vpop.f32.mrf.mxu0
        %1735 = vdwg.mxu0
        %v1736 = vadd.f32 %v1650, %v1728
        %v1737 = vadd.f32 %v1651, %v1733
        %1738 = vst.msk [vmem:[%s282] sm:$0xff] %vm722, %v1736
        %1739 = vst.msk [vmem:[%s282 + $0x8] sm:$0xff] %vm722, %v1737
        %s1740 = sand.u32 %s186, 1
        %s1741 = scalar_lea.sflag [#allocation3], %s1740
        %s1742 = sand.u32 %s186, 1
        %s1743 = smul.addr %s1742, 16
        %s1744 = scalar_lea.vmem [#allocation2], %s1743
        // Predicated region
        $region49: #{tpu_custom_call.1} parent=47 // pred_check
          %p1745 = pneg %p196
        $region50: #{tpu_custom_call.1} parent=47 // pred_check_branch
          %1747 = sbr.rel (%p1745) target = $region52
        $region51: #{tpu_custom_call.1} parent=47 // pred_region
          %s1749 = ssub.s32 256, 256
          %1750 = vsyncadd %s1741, %s1749
          %s1751 = smul.addr %s21, 2
          %s1752 = smul.addr %s1751, 128
          %s1753 = scalar_lea.hbm %s7, %s1752
          %s1754 = sshll.u32 %s1744, 4
          %s1755 = int_to_ptr.vmem [resolvable:$true] %s1754
          %1760 = dma.vmem_to_hbm [thread:$0]  %s1755, 256, %s1753, %s1741, 128, 128, 8
        $region52: #{tpu_custom_call.1} parent=47 // pred_fallthru
          _
      $region48: #{tpu_custom_call.1} parent=5 // pred_fallthru
        _
      %p1761 = scmp.le.s32.totalorder 2, %s16
      // Predicated region
      $region53: #{tpu_custom_call.1} parent=5 // pred_check
        %p1762 = pneg %p1761
      $region54: #{tpu_custom_call.1} parent=5 // pred_check_branch
        %1764 = sbr.rel (%p1762) target = $region56
      $region55: #{tpu_custom_call.1} parent=5 // pred_region
        %s1765 = ssub.s32 %s16, 2
        // Predicated region
        $region57: #{tpu_custom_call.1} parent=55 // pred_check
          %p1766 = pneg %p202
        $region58: #{tpu_custom_call.1} parent=55 // pred_check_branch
          %1768 = sbr.rel (%p1766) target = $region60
        $region59: #{tpu_custom_call.1} parent=55 // pred_region
          %s1769 = sand.u32 %s187, 1
          %s1770 = scalar_lea.sflag [#allocation3], %s1769
          %s1771 = sand.u32 %s187, 1
          %s1772 = smul.addr %s1771, 16
          %s1773 = scalar_lea.vmem [#allocation2], %s1772
          %1774 = dma.done %s1770, 256
        $region60: #{tpu_custom_call.1} parent=55 // pred_fallthru
          _
      $region56: #{tpu_custom_call.1} parent=5 // pred_fallthru
        _
    $region6: #{tpu_custom_call.1} parent=1 // loop_footer
      %s20 = sadd.s32 1, %s16
    $region7: #{tpu_custom_call.1} parent=1 // loop_footer_branch
      %15 = sbr.rel target = $region3
    $region8: #{tpu_custom_call.1} parent=1 // loop_exit
      _
    %1775 = vsyncpa [#allocation3], 1
    %s1776 = scalar_lea.sflag [#allocation3], 1
    %1777 = vsyncpa %s1776, 1

</llo_original>
